<compile_context>
chip_gen: v7x
topology: tpu7x:2x2x1
jax: 0.10.0
libtpu: 0.0.40
codegen_flags: <defaults>
</compile_context>

<pallas_src>
import math

import jax
import jax.numpy as jnp
from jax.experimental import pallas as pl
from jax.experimental.pallas import tpu as pltpu

# Explicit scoped-VMEM limit, safe on v5e/v6e (128 MiB) and v7x (64 MiB physical).
_VMEM_LIMIT = 32 * 1024 * 1024
_NEG = -1e30


def _round_up(x, m):
    return (x + m - 1) // m * m


def _pick_tile(n, candidates):
    for c in candidates:
        if n >= c and n % c == 0:
            return c
    return n


# --------------------------------- kernels ---------------------------------- #

def _q_proj_rope_kernel(x_ref, w_ref, b_ref, cos_ref, sin_ref, o_ref):
    """Full-width Q projection (all heads per step) fused with rotate-half RoPE.

    x_ref:   (1, tt, D)      bf16
    w_ref:   (D, D)          bf16  head-major, per-head deinterleaved columns,
                                   softmax scale folded in
    b_ref:   (1, D)          f32   (scale folded in)
    cos_ref: (tt, d_k)       f32   [cos | cos]
    sin_ref: (tt, d_k)       f32   [-sin | +sin]  (rotation sign folded in)
    o_ref:   (1, H, tt, d_k) bf16  head-major output
    """
    H, d_k = o_ref.shape[1], o_ref.shape[3]
    x = x_ref[0].astype(jnp.bfloat16)
    proj = jnp.dot(x, w_ref[...], preferred_element_type=jnp.float32) + b_ref[...]
    cos = cos_ref[...]
    sin = sin_ref[...]
    for h in range(H):                                    # static unroll over heads
        ph = proj[:, h * d_k:(h + 1) * d_k]               # (tt, d_k), lane-aligned slice
        rot = pltpu.roll(ph, shift=d_k // 2, axis=1)      # rotate-half on the XLU
        o_ref[0, h] = (ph * cos + rot * sin).astype(o_ref.dtype)


def _kv_proj_rope_kernel(k_ref, v_ref, wk_ref, bk_ref, wv_ref, bv_ref,
                         cos_ref, sin_ref, kT_ref, vh_ref):
    """Fused K (RoPE, transposed head-major out) and V projections.

    k_ref/v_ref: (1, tt, D) bf16
    wk/wv:       (D, D)     bf16 ; bk/bv: (1, D) f32
    cos/sin:     (tt, d_k)  f32
    kT_ref:      (1, H, d_k, tt) bf16   keys, transposed head-major
    vh_ref:      (1, H, tt, d_k) bf16   values, head-major
    """
    H, d_k = vh_ref.shape[1], vh_ref.shape[3]
    kx = k_ref[0].astype(jnp.bfloat16)
    vx = v_ref[0].astype(jnp.bfloat16)
    kp = jnp.dot(kx, wk_ref[...], preferred_element_type=jnp.float32) + bk_ref[...]
    vp = jnp.dot(vx, wv_ref[...], preferred_element_type=jnp.float32) + bv_ref[...]
    cos = cos_ref[...]
    sin = sin_ref[...]
    for h in range(H):
        kh = kp[:, h * d_k:(h + 1) * d_k]
        rot = pltpu.roll(kh, shift=d_k // 2, axis=1)
        k_rope = kh * cos + rot * sin                     # (tt, d_k) f32
        # One transpose here (per head per tile) instead of one per KV step in attention.
        kT_ref[0, h] = k_rope.T.astype(kT_ref.dtype)      # (d_k, tt)
        vh_ref[0, h] = vp[:, h * d_k:(h + 1) * d_k].astype(vh_ref.dtype)


def _flash_attn_kernel(q_ref, kT_ref, v_ref, bias_ref, o_ref, m_sc, l_sc, acc_sc):
    """Flash attention over KV tiles with online softmax.

    grid = (B, H, n_q, n_kv); the KV axis (last) is the reduction.
    q_ref:    (1, 1, q_tile, d_k)   bf16  (softmax scale folded into W_q)
    kT_ref:   (1, 1, d_k, kv_tile)  bf16
    v_ref:    (1, 1, kv_tile, d_k)  bf16
    bias_ref: (1, Tm_blk, kv_tile)  f32   additive mask bias (0 / -1e30)
    o_ref:    (1, q_tile, d_k)      bf16  slab of the (B, T1, D) concat-head output
    scratch:  m/l (q_tile, 1), acc (q_tile, d_k)  f32
    """
    n = pl.program_id(3)

    @pl.when(n == 0)
    def _():
        m_sc[...] = jnp.full_like(m_sc, -jnp.inf)
        l_sc[...] = jnp.zeros_like(l_sc)
        acc_sc[...] = jnp.zeros_like(acc_sc)

    # Scale is already folded into W_q/b_q — no per-step scalar multiply (VPU).
    s = jnp.dot(q_ref[0, 0], kT_ref[0, 0], preferred_element_type=jnp.float32)
    s = s + bias_ref[0]                                   # broadcasts over rows if Tm_blk == 1

    m_prev = m_sc[...]
    m_new = jnp.maximum(m_prev, jnp.max(s, axis=-1, keepdims=True))
    alpha = jnp.exp(m_prev - m_new)
    p = jnp.exp(s - m_new)                                # (q_tile, kv_tile) f32
    l_sc[...] = alpha * l_sc[...] + jnp.sum(p, axis=-1, keepdims=True)
    acc_sc[...] = alpha * acc_sc[...] + jnp.dot(
        p.astype(v_ref.dtype), v_ref[0, 0], preferred_element_type=jnp.float32)
    m_sc[...] = m_new

    # TODO(synk): dropout on attention probabilities is eval-mode identity.

    @pl.when(n == pl.num_programs(3) - 1)
    def _():
        inv_l = pl.reciprocal(l_sc[...], approx=False)    # exact; runs once per Q tile
        o_ref[0] = (acc_sc[...] * inv_l).astype(o_ref.dtype)


def _out_proj_kernel(x_ref, w_ref, b_ref, o_ref):
    """Output projection as a plain tiled matmul, accumulating into o_ref.

    grid = (B, n_t, n_d, n_k); the contraction over d_model (last axis) is the
    reduction, so the f32 output block stays VMEM-resident and is accumulated
    in place (no separate scratch, no final copy).
    x_ref: (1, t_tile, k_tile)  bf16   slab of the concat-head attention output
    w_ref: (k_tile, d_tile)     bf16
    b_ref: (1, d_tile)          f32
    o_ref: (1, t_tile, d_tile)  f32
    """
    kk = pl.program_id(3)

    @pl.when(kk == 0)
    def _():
        o_ref[0] = jnp.broadcast_to(b_ref[...], o_ref.shape[1:])

    o_ref[0] += jnp.dot(x_ref[0], w_ref[...], preferred_element_type=jnp.float32)


# -------------------------------- wrappers ----------------------------------- #

def _q_projection(x, w, b, cos, sin, H, d_k):
    B, Tp, D = x.shape
    tt = _pick_tile(Tp, (512, 256, 128))
    return pl.pallas_call(
        _q_proj_rope_kernel,
        out_shape=jax.ShapeDtypeStruct((B, H, Tp, d_k), jnp.bfloat16),
        grid=(B, Tp // tt),
        in_specs=[
            pl.BlockSpec((1, tt, D), lambda b_, t: (b_, t, 0)),
            pl.BlockSpec((D, D), lambda b_, t: (0, 0)),
            pl.BlockSpec((1, D), lambda b_, t: (0, 0)),
            pl.BlockSpec((tt, d_k), lambda b_, t: (t, 0)),
            pl.BlockSpec((tt, d_k), lambda b_, t: (t, 0)),
        ],
        out_specs=pl.BlockSpec((1, H, tt, d_k), lambda b_, t: (b_, 0, t, 0)),
        compiler_params=pltpu.CompilerParams(
            dimension_semantics=("parallel", "parallel"),
            vmem_limit_bytes=_VMEM_LIMIT),
    )(x, w, b, cos, sin)


def _kv_projection(kx, vx, wk, bk, wv, bv, cos, sin, H, d_k):
    B, Tp, D = kx.shape
    tt = _pick_tile(Tp, (512, 256, 128))
    return pl.pallas_call(
        _kv_proj_rope_kernel,
        out_shape=(jax.ShapeDtypeStruct((B, H, d_k, Tp), jnp.bfloat16),
                   jax.ShapeDtypeStruct((B, H, Tp, d_k), jnp.bfloat16)),
        grid=(B, Tp // tt),
        in_specs=[
            pl.BlockSpec((1, tt, D), lambda b_, t: (b_, t, 0)),
            pl.BlockSpec((1, tt, D), lambda b_, t: (b_, t, 0)),
            pl.BlockSpec((D, D), lambda b_, t: (0, 0)),
            pl.BlockSpec((1, D), lambda b_, t: (0, 0)),
            pl.BlockSpec((D, D), lambda b_, t: (0, 0)),
            pl.BlockSpec((1, D), lambda b_, t: (0, 0)),
            pl.BlockSpec((tt, d_k), lambda b_, t: (t, 0)),
            pl.BlockSpec((tt, d_k), lambda b_, t: (t, 0)),
        ],
        out_specs=(
            pl.BlockSpec((1, H, d_k, tt), lambda b_, t: (b_, 0, 0, t)),
            pl.BlockSpec((1, H, tt, d_k), lambda b_, t: (b_, 0, t, 0)),
        ),
        compiler_params=pltpu.CompilerParams(
            dimension_semantics=("parallel", "parallel"),
            vmem_limit_bytes=_VMEM_LIMIT),
    )(kx, vx, wk, bk, wv, bv, cos, sin)


def _flash_attention(qh, kT, vh, bias, q_tile, kv_tile):
    B, H, T1p, d_k = qh.shape
    T2p = vh.shape[2]
    D = H * d_k
    Tm = bias.shape[1]
    n_q, n_kv = T1p // q_tile, T2p // kv_tile
    if Tm == 1:
        tm_blk = 1
        bias_map = lambda b_, h, qi, n: (b_, 0, n)
    else:
        tm_blk = q_tile
        bias_map = lambda b_, h, qi, n: (b_, qi, n)
    return pl.pallas_call(
        _flash_attn_kernel,
        # Output is written directly in (B, T1, D) concat-head layout: the head
        # grid index selects the d_k-wide column block.
        out_shape=jax.ShapeDtypeStruct((B, T1p, D), jnp.bfloat16),
        grid=(B, H, n_q, n_kv),
        in_specs=[
            pl.BlockSpec((1, 1, q_tile, d_k), lambda b_, h, qi, n: (b_, h, qi, 0)),
            pl.BlockSpec((1, 1, d_k, kv_tile), lambda b_, h, qi, n: (b_, h, 0, n)),
            pl.BlockSpec((1, 1, kv_tile, d_k), lambda b_, h, qi, n: (b_, h, n, 0)),
            pl.BlockSpec((1, tm_blk, kv_tile), bias_map),
        ],
        out_specs=pl.BlockSpec((1, q_tile, d_k), lambda b_, h, qi, n: (b_, qi, h)),
        scratch_shapes=[
            pltpu.VMEM((q_tile, 1), jnp.float32),      # running max
            pltpu.VMEM((q_tile, 1), jnp.float32),      # running denominator
            pltpu.VMEM((q_tile, d_k), jnp.float32),    # running numerator
        ],
        compiler_params=pltpu.CompilerParams(
            dimension_semantics=("parallel", "parallel", "parallel", "arbitrary"),
            vmem_limit_bytes=_VMEM_LIMIT),
    )(qh, kT, vh, bias)


def _out_projection(att, w, b, t_tile):
    B, T1p, D = att.shape
    d_tile = _pick_tile(D, (512, 256, 128))
    k_tile = _pick_tile(D, (1024, 512, 256, 128))
    return pl.pallas_call(
        _out_proj_kernel,
        out_shape=jax.ShapeDtypeStruct((B, T1p, D), jnp.float32),
        grid=(B, T1p // t_tile, D // d_tile, D // k_tile),
        in_specs=[
            pl.BlockSpec((1, t_tile, k_tile), lambda b_, t, d, kk: (b_, t, kk)),
            pl.BlockSpec((k_tile, d_tile), lambda b_, t, d, kk: (kk, d)),
            pl.BlockSpec((1, d_tile), lambda b_, t, d, kk: (0, d)),
        ],
        out_specs=pl.BlockSpec((1, t_tile, d_tile), lambda b_, t, d, kk: (b_, t, d)),
        compiler_params=pltpu.CompilerParams(
            dimension_semantics=("parallel", "parallel", "parallel", "arbitrary"),
            vmem_limit_bytes=_VMEM_LIMIT),
    )(att, w, b)


# ----------------------------- module-level glue ----------------------------- #

def rotary_mha_forward(params, q, k, v, mask, num_heads):
    B, T1, D = q.shape
    T2 = k.shape[1]
    H = num_heads
    assert D % H == 0
    d_k = D // H
    assert d_k % 128 == 0, "this kernel assumes a lane-aligned head width (d_k % 128 == 0)"

    # ---- tile sizes: 256-wide tiles fill the v6e/v7x MXU; ragged edges padded ----
    q_tile = min(256, _round_up(T1, 8))
    kv_tile = min(256, _round_up(T2, 128))
    T1p = _round_up(T1, q_tile)
    T2p = _round_up(T2, kv_tile)

    # ---- mask -> compact additive bias; padded keys masked out ----
    if mask.ndim == 4:
        assert mask.shape[1] == 1, "per-head masks are not supported"
        mask = mask[:, 0]
    Tm = mask.shape[1]
    assert Tm in (1, T1), "mask must have shape (B, 1, 1 or T1, T2)"
    bias = jnp.where(mask, 0.0, _NEG).astype(jnp.float32)               # (B, Tm, T2)
    if T2p > T2:
        bias = jnp.pad(bias, ((0, 0), (0, 0), (0, T2p - T2)), constant_values=_NEG)
    if Tm != 1 and T1p > T1:
        bias = jnp.pad(bias, ((0, 0), (0, T1p - T1), (0, 0)), constant_values=0.0)

    # ---- activations: cast to bf16 once (halves projection DMA), pad time ----
    qx = jnp.pad(q.astype(jnp.bfloat16), ((0, 0), (0, T1p - T1), (0, 0)))
    kx = jnp.pad(k.astype(jnp.bfloat16), ((0, 0), (0, T2p - T2), (0, 0)))
    vx = jnp.pad(v.astype(jnp.bfloat16), ((0, 0), (0, T2p - T2), (0, 0)))

    # ---- one-time weight re-layout (host constants, no activation reshapes) ----
    # Deinterleave each head's Q/K output features (evens then odds) so the
    # reference's interleaved-pair RoPE becomes rotate-half; attention scores
    # are invariant because the same permutation hits both Q and K.  The
    # softmax 1/sqrt(d_k) is folded into w_q / b_q.
    perm = jnp.concatenate([jnp.arange(0, d_k, 2), jnp.arange(1, d_k, 2)])
    scale = 1.0 / math.sqrt(d_k)

    def qk_weight(w, b, s):
        wd = (w.reshape(D, H, d_k)[:, :, perm] * s).reshape(D, D)
        bd = (b.reshape(H, d_k)[:, perm] * s).reshape(1, D)
        return wd.astype(jnp.bfloat16), bd.astype(jnp.float32)

    w_q, b_q = qk_weight(params["w_q"], params["b_q"], scale)
    w_k, b_k = qk_weight(params["w_k"], params["b_k"], 1.0)
    w_v = params["w_v"].astype(jnp.bfloat16)
    b_v = params["b_v"].reshape(1, D).astype(jnp.float32)
    w_o = params["w_o"].astype(jnp.bfloat16)
    b_o = params["b_o"].reshape(1, D).astype(jnp.float32)

    # RoPE tables at per-head width only, rotate-half layout, rotation sign in sin.
    def rope_tables(T):
        pos = jnp.arange(T, dtype=jnp.float32)[:, None]
        theta = pos / (10000.0 ** (jnp.arange(0, d_k, 2, dtype=jnp.float32) / d_k))
        cos = jnp.concatenate([jnp.cos(theta), jnp.cos(theta)], axis=-1)
        sin = jnp.concatenate([-jnp.sin(theta), jnp.sin(theta)], axis=-1)
        return cos, sin

    cos_q, sin_q = rope_tables(T1p)
    cos_k, sin_k = rope_tables(T2p)

    qh = _q_projection(qx, w_q, b_q, cos_q, sin_q, H, d_k)               # (B, H, T1p, d_k)
    kT, vh = _kv_projection(kx, vx, w_k, b_k, w_v, b_v, cos_k, sin_k, H, d_k)
    att = _flash_attention(qh, kT, vh, bias, q_tile, kv_tile)            # (B, T1p, D) bf16
    out = _out_projection(att, w_o, b_o, q_tile)                         # (B, T1p, D) f32
    return out[:, :T1, :]


# ------------------------------ pure-JAX reference ---------------------------- #

def reference_forward(params, q, k, v, mask, num_heads):
    B, T1, D = q.shape
    T2 = k.shape[1]
    d_k = D // num_heads

    def lin(x, w, b):
        return x @ w + b

    qh = lin(q, params["w_q"], params["b_q"]).reshape(B, T1, num_heads, d_k).transpose(0, 2, 1, 3)
    kh = lin(k, params["w_k"], params["b_k"]).reshape(B, T2, num_heads, d_k).transpose(0, 2, 1, 3)
    vh = lin(v, params["w_v"], params["b_v"]).reshape(B, T2, num_heads, d_k).transpose(0, 2, 1, 3)

    def rope(x, T):
        pos = jnp.arange(T, dtype=jnp.float32)[:, None]
        theta = pos / (10000.0 ** (jnp.arange(0, d_k, 2, dtype=jnp.float32) / d_k))
        sin = jnp.repeat(jnp.sin(theta), 2, axis=-1)[None, None]
        cos = jnp.repeat(jnp.cos(theta), 2, axis=-1)[None, None]
        rot = jnp.stack([-x[..., 1::2], x[..., 0::2]], axis=-1).reshape(x.shape)
        return x * cos + rot * sin

    qh = rope(qh, T1)
    kh = rope(kh, T2)
    s = (qh @ kh.transpose(0, 1, 3, 2)) / math.sqrt(d_k)
    s = jnp.where(mask, s, -jnp.inf)
    p = jax.nn.softmax(s, axis=-1)
    o = (p @ vh).transpose(0, 2, 1, 3).reshape(B, T1, D)
    return lin(o, params["w_o"], params["b_o"])


# ------------------------------------ main ------------------------------------ #

if __name__ == "__main__":
    # d_k = 128 (lane-aligned); T1 = 512 exercises query tiling (2 x 256);
    # T2 = 384 exercises KV padding (padded to 512 = 2 x 256 KV tiles).
    B, T1, T2, D, H = 2, 512, 384, 256, 2
    key = jax.random.PRNGKey(0)
    ks = jax.random.split(key, 11)

    scale = 1.0 / math.sqrt(D)
    params = {
        "w_q": jax.random.uniform(ks[0], (D, D), jnp.float32, -scale, scale),
        "b_q": jax.random.uniform(ks[1], (D,), jnp.float32, -scale, scale),
        "w_k": jax.random.uniform(ks[2], (D, D), jnp.float32, -scale, scale),
        "b_k": jax.random.uniform(ks[3], (D,), jnp.float32, -scale, scale),
        "w_v": jax.random.uniform(ks[4], (D, D), jnp.float32, -scale, scale),
        "b_v": jax.random.uniform(ks[5], (D,), jnp.float32, -scale, scale),
        "w_o": jax.random.uniform(ks[6], (D, D), jnp.float32, -scale, scale),
        "b_o": jax.random.uniform(ks[7], (D,), jnp.float32, -scale, scale),
    }

    q = jax.random.normal(ks[8], (B, T1, D), jnp.float32)
    k = jax.random.normal(ks[9], (B, T2, D), jnp.float32)
    v = jax.random.normal(ks[10], (B, T2, D), jnp.float32)
    # mask of shape (B, 1, 1, T2): mask out the last 64 keys of batch 1
    mask = jnp.ones((B, 1, 1, T2), dtype=jnp.bool_).at[1, 0, 0, -64:].set(False)

    out = jax.block_until_ready(rotary_mha_forward(params, q, k, v, mask, H))
    ref = jax.block_until_ready(reference_forward(params, q, k, v, mask, H))

    assert out.shape == (B, T1, D)
    # bf16 matmul operands => loosened tolerance vs the f32 reference.
    assert jnp.allclose(out, ref, rtol=2e-2, atol=2e-2), (
        f"max abs diff = {float(jnp.max(jnp.abs(out - ref)))}")

    print("KERNEL_OK")
</pallas_src>

<mosaic_0001>
module attributes {stable_mosaic.version = 11 : i64} {
  func.func @_q_proj_rope_kernel(%arg0: i32, %arg1: i32, %arg2: memref<1x512x256xbf16, #tpu.memory_space<vmem>>, %arg3: memref<256x256xbf16, #tpu.memory_space<vmem>>, %arg4: memref<1x256xf32, #tpu.memory_space<vmem>>, %arg5: memref<512x128xf32, #tpu.memory_space<vmem>>, %arg6: memref<512x128xf32, #tpu.memory_space<vmem>>, %arg7: memref<1x2x512x128xbf16, #tpu.memory_space<vmem>>) attributes {dimension_semantics = [#tpu.dimension_semantics<parallel>, #tpu.dimension_semantics<parallel>], iteration_bounds = array<i64: 2, 1>, scalar_prefetch = 0 : i64, scratch_operands = 0 : i64, tpu.core_type = #tpu.core_type<tc>, window_params = [{transform_indices = @transform_0, window_bounds = array<i64: 1, 512, 256>}, {pipeline_mode = #tpu.pipeline_mode<synchronous>, transform_indices = @transform_1, window_bounds = array<i64: 256, 256>}, {pipeline_mode = #tpu.pipeline_mode<synchronous>, transform_indices = @transform_2, window_bounds = array<i64: 1, 256>}, {transform_indices = @transform_3, window_bounds = array<i64: 512, 128>}, {transform_indices = @transform_4, window_bounds = array<i64: 512, 128>}, {transform_indices = @transform_5, window_bounds = array<i64: 1, 2, 512, 128>}]} {
    %c0 = arith.constant 0 : index
    %c0_0 = arith.constant 0 : index
    %c0_1 = arith.constant 0 : index
    %0 = vector.load %arg2[%c0, %c0_0, %c0_1] : memref<1x512x256xbf16, #tpu.memory_space<vmem>>, vector<1x512x256xbf16>
    %1 = vector.shape_cast %0 : vector<1x512x256xbf16> to vector<512x256xbf16>
    %c0_2 = arith.constant 0 : index
    %c0_3 = arith.constant 0 : index
    %2 = vector.load %arg3[%c0_2, %c0_3] : memref<256x256xbf16, #tpu.memory_space<vmem>>, vector<256x256xbf16>
    %cst = arith.constant dense<0.000000e+00> : vector<512x256xf32>
    %3 = tpu.matmul %1, %2, %cst {dimension_numbers = #tpu.dot_dimension_numbers<[1], [0], [0], [1], [0, 0, 1, 1], [], []>} : vector<512x256xbf16>, vector<256x256xbf16>, vector<512x256xf32> -> vector<512x256xf32>
    %c0_4 = arith.constant 0 : index
    %c0_5 = arith.constant 0 : index
    %4 = vector.load %arg4[%c0_4, %c0_5] : memref<1x256xf32, #tpu.memory_space<vmem>>, vector<1x256xf32>
    %5 = vector.broadcast %4 : vector<1x256xf32> to vector<512x256xf32>
    %6 = arith.addf %3, %5 : vector<512x256xf32>
    %c0_6 = arith.constant 0 : index
    %c0_7 = arith.constant 0 : index
    %7 = vector.load %arg5[%c0_6, %c0_7] : memref<512x128xf32, #tpu.memory_space<vmem>>, vector<512x128xf32>
    %c0_8 = arith.constant 0 : index
    %c0_9 = arith.constant 0 : index
    %8 = vector.load %arg6[%c0_8, %c0_9] : memref<512x128xf32, #tpu.memory_space<vmem>>, vector<512x128xf32>
    %9 = vector.extract_strided_slice %6 {offsets = [0, 0], sizes = [512, 128], strides = [1, 1]} : vector<512x256xf32> to vector<512x128xf32>
    %c64_i32 = arith.constant 64 : i32
    %10 = tpu.dynamic_rotate %9 by %c64_i32 dim 1 : vector<512x128xf32>, i32 -> vector<512x128xf32>
    %11 = arith.mulf %9, %7 : vector<512x128xf32>
    %12 = arith.mulf %10, %8 : vector<512x128xf32>
    %13 = arith.addf %11, %12 : vector<512x128xf32>
    %14 = arith.truncf %13 : vector<512x128xf32> to vector<512x128xbf16>
    %c0_10 = arith.constant 0 : index
    %c0_11 = arith.constant 0 : index
    %c0_12 = arith.constant 0 : index
    %c0_13 = arith.constant 0 : index
    %15 = vector.load %arg7[%c0_10, %c0_11, %c0_12, %c0_13] : memref<1x2x512x128xbf16, #tpu.memory_space<vmem>>, vector<1x1x512x128xbf16>
    %16 = vector.shape_cast %15 : vector<1x1x512x128xbf16> to vector<512x128xbf16>
    %17 = vector.shape_cast %14 : vector<512x128xbf16> to vector<1x1x512x128xbf16>
    tpu.vector_store %arg7[%c0_10, %c0_11, %c0_12, %c0_13], %17 {strides = array<i32>} : memref<1x2x512x128xbf16, #tpu.memory_space<vmem>>, vector<1x1x512x128xbf16>,
    %18 = vector.extract_strided_slice %6 {offsets = [0, 128], sizes = [512, 128], strides = [1, 1]} : vector<512x256xf32> to vector<512x128xf32>
    %c64_i32_14 = arith.constant 64 : i32
    %19 = tpu.dynamic_rotate %18 by %c64_i32_14 dim 1 : vector<512x128xf32>, i32 -> vector<512x128xf32>
    %20 = arith.mulf %18, %7 : vector<512x128xf32>
    %21 = arith.mulf %19, %8 : vector<512x128xf32>
    %22 = arith.addf %20, %21 : vector<512x128xf32>
    %23 = arith.truncf %22 : vector<512x128xf32> to vector<512x128xbf16>
    %c0_15 = arith.constant 0 : index
    %c1 = arith.constant 1 : index
    %c0_16 = arith.constant 0 : index
    %c0_17 = arith.constant 0 : index
    %24 = vector.load %arg7[%c0_15, %c1, %c0_16, %c0_17] : memref<1x2x512x128xbf16, #tpu.memory_space<vmem>>, vector<1x1x512x128xbf16>
    %25 = vector.shape_cast %24 : vector<1x1x512x128xbf16> to vector<512x128xbf16>
    %26 = vector.shape_cast %23 : vector<512x128xbf16> to vector<1x1x512x128xbf16>
    tpu.vector_store %arg7[%c0_15, %c1, %c0_16, %c0_17], %26 {strides = array<i32>} : memref<1x2x512x128xbf16, #tpu.memory_space<vmem>>, vector<1x1x512x128xbf16>,
    return
  }
  func.func @transform_0(%arg0: i32, %arg1: i32) -> (i32, i32, i32) {
    %c0_i32 = arith.constant 0 : i32
    %c0_i32_0 = arith.constant 0 : i32
    return %arg0, %arg1, %c0_i32 : i32, i32, i32
  }
  func.func @transform_1(%arg0: i32, %arg1: i32) -> (i32, i32) {
    %c0_i32 = arith.constant 0 : i32
    %c0_i32_0 = arith.constant 0 : i32
    %c0_i32_1 = arith.constant 0 : i32
    return %c0_i32, %c0_i32_0 : i32, i32
  }
  func.func @transform_2(%arg0: i32, %arg1: i32) -> (i32, i32) {
    %c0_i32 = arith.constant 0 : i32
    %c0_i32_0 = arith.constant 0 : i32
    %c0_i32_1 = arith.constant 0 : i32
    return %c0_i32, %c0_i32_0 : i32, i32
  }
  func.func @transform_3(%arg0: i32, %arg1: i32) -> (i32, i32) {
    %c0_i32 = arith.constant 0 : i32
    %c0_i32_0 = arith.constant 0 : i32
    return %arg1, %c0_i32 : i32, i32
  }
  func.func @transform_4(%arg0: i32, %arg1: i32) -> (i32, i32) {
    %c0_i32 = arith.constant 0 : i32
    %c0_i32_0 = arith.constant 0 : i32
    return %arg1, %c0_i32 : i32, i32
  }
  func.func @transform_5(%arg0: i32, %arg1: i32) -> (i32, i32, i32, i32) {
    %c0_i32 = arith.constant 0 : i32
    %c0_i32_0 = arith.constant 0 : i32
    %c0_i32_1 = arith.constant 0 : i32
    return %arg0, %c0_i32, %arg1, %c0_i32_0 : i32, i32, i32, i32
  }
}

</mosaic_0001>

<llo_original>
// kernel: tpu_custom_call.1
$region0: #{tpu_custom_call.1}
  #allocation0 [shape = 'u32[]', space=smem, size = 0x4, offset = 0x4, fixed_abs, tag = 'smem constant byte address 0x4 - core index']
  #allocation1 [shape = 'u32[144,128]{1,0:T(1,128)}', space=vmem, size = 0x12000, scoped, tag = 'internal scratch']
  %s0 = inlined_call_operand.hbm [shape: bf16[2,512,256], index: 0, kind: input, shape index: {}]
  %s1 = inlined_call_operand.hbm [shape: bf16[256,256], index: 1, kind: input, shape index: {}]
  %s2 = inlined_call_operand.vmem [shape: f32[1,256], index: 2, kind: input, shape index: {}]
  %s3 = inlined_call_operand.hbm [shape: f32[512,128], index: 3, kind: input, shape index: {}]
  %s4 = inlined_call_operand.hbm [shape: f32[512,128], index: 4, kind: input, shape index: {}]
  %s5 = inlined_call_operand.hbm [shape: bf16[2,2,512,128], index: 5, kind: output, shape index: {}]
  %s6 = sld [smem:[#allocation0]]
  $region69: #{tpu_custom_call.1} parent=0
    _
  %s8 = ssub.s32 1, %s6
  %s9 = scalar_select 0, %s8, %s6
  $region1: #{tpu_custom_call.1} parent=0
    #allocation2 [shape = 'u8[524288]{0}', space=vmem, size = 0x80000, scoped, tag = 'input window, operand 0']
    #allocation3 [shape = 's32[2]{0}', space=sflag, size = 0x8, scoped, tag = 'scoped memory for tpu_custom_call.1']
    #allocation4 [shape = 's32[2]{0}', space=sflag, size = 0x8, scoped, tag = 'scoped memory for tpu_custom_call.1']
    #allocation5 [shape = 'u8[131072]{0}', space=vmem, size = 0x20000, scoped, tag = 'input window, operand 1, single buffered']
    #allocation6 [shape = 's32[1]{0}', space=sflag, size = 0x4, scoped, tag = 'scoped memory for tpu_custom_call.1']
    #allocation7 [shape = 'u8[262144]{0}', space=vmem, size = 0x40000, scoped, tag = 'input window, operand 3, single buffered']
    #allocation8 [shape = 'u8[262144]{0}', space=vmem, size = 0x40000, scoped, tag = 'input window, operand 4, single buffered']
    #allocation9 [shape = 's32[1]{0}', space=sflag, size = 0x4, scoped, tag = 'scoped memory for tpu_custom_call.1']
    #allocation10 [shape = 'u8[524288]{0}', space=vmem, size = 0x80000, scoped, tag = 'output window, operand 0']
    %10 = vsyncpa [#allocation3], 0
    %s11 = scalar_lea.sflag [#allocation3], 1
    %12 = vsyncpa %s11, 0
    %13 = vsyncpa [#allocation6], 0
    %14 = vsyncpa [#allocation9], 0
    %15 = vsyncpa [#allocation4], 0
    %s16 = scalar_lea.sflag [#allocation4], 1
    %17 = vsyncpa %s16, 0
    loop: start=0, step=1, limit=4
    $region2: #{tpu_custom_call.1} parent=1 // loop_pre_header
      _
    $region3: #{tpu_custom_call.1} parent=1 // loop_header
      %s19 = sphi 0, %s23
      %p20 = scmp.ge.s32.totalorder %s19, 4
      %s26 = sphi 0, %s38
      %s27 = sphi 0, %s34
      %s28 = sphi 0, %s26
      %s29 = sphi 0, %s27
      %s30 = sphi 0, %s28
      %s31 = sphi 0, %s29
      %s43 = sphi 0, %s45
      %s46 = sphi 0, %s43
      %s47 = sphi 0, %s46
      %s63 = sphi 0, %s47
      %s67 = sphi 0, %s67
      %s69 = sphi 0, %s67
      %s70 = sphi 0, %s69
      %s84 = sphi 0, %s70
      %s88 = sphi 0, %s88
      %s90 = sphi 0, %s88
      %s91 = sphi 0, %s90
      %s105 = sphi 0, %s91
      %s111 = sphi 0, %s113
      %s114 = sphi 0, %s111
      %s115 = sphi 0, %s114
      %s131 = sphi 0, %s115
      %s137 = sphi 0, %s139
      %s140 = sphi 0, %s137
      %s141 = sphi 0, %s140
      %s157 = sphi 0, %s141
      %s165 = sphi 0, %s167
      %s168 = sphi 0, %s165
      %s169 = sphi 0, %s168
      %s185 = sphi 0, %s169
    $region4: #{tpu_custom_call.1} parent=1 // loop_header_branch
      %22 = sbr.rel (%p20) target = $region8
    $region5: #{tpu_custom_call.1} parent=1 // loop_body
      %s24 = ssub.s32 %s19, 1
      %s25 = ssub.s32 %s19, 2
      %s32 = sadd.s32 1, %s27
      %p33 = scmp.ge.s32.totalorder %s32, 1
      %s34 = scalar_select %p33, 0, %s32
      %s35 = sadd.s32 1, %s26
      %s36 = scalar_select %p33, %s35, %s26
      %p37 = scmp.ge.s32.totalorder %s36, 2
      %s38 = scalar_select %p37, 0, %s36
      %s39 = ssub.s32 %s26, %s38
      %s40 = ssub.s32 %s27, %s34
      %s41 = sor.u32 %s39, %s40
      %p42 = scmp.eq.s32.totalorder %s41, 0
      %s44 = sadd.s32 %s43, 1
      %s45 = scalar_select %p42, %s43, %s44
      %p48 = pneg %p42
      %p49 = scmp.eq.s32.totalorder %s19, 1
      %p50 = por %p48, %p49
      %p51 = scmp.ne.s32.totalorder %s43, %s46
      %p52 = scmp.eq.s32.totalorder %s19, 0
      %p53 = por %p51, %p52
      %p54 = scmp.ne.s32.totalorder %s43, %s46
      %p55 = scmp.eq.s32.totalorder %s24, 1
      %p56 = por %p54, %p55
      %p57 = scmp.ne.s32.totalorder %s46, %s47
      %p58 = scmp.eq.s32.totalorder %s24, 0
      %p59 = por %p57, %p58
      %p60 = scmp.ne.s32.totalorder %s46, %s47
      %p61 = scmp.eq.s32.totalorder %s25, 1
      %p62 = por %p60, %p61
      %p64 = scmp.ne.s32.totalorder %s47, %s63
      %p65 = scmp.eq.s32.totalorder %s25, 0
      %p66 = por %p64, %p65
      %s68 = sadd.s32 %s67, 1
      %p71 = scmp.eq.s32.totalorder %s19, 1
      %p72 = scmp.ne.s32.totalorder %s67, %s69
      %p73 = scmp.eq.s32.totalorder %s19, 0
      %p74 = por %p72, %p73
      %p75 = scmp.ne.s32.totalorder %s67, %s69
      %p76 = scmp.eq.s32.totalorder %s24, 1
      %p77 = por %p75, %p76
      %p78 = scmp.ne.s32.totalorder %s69, %s70
      %p79 = scmp.eq.s32.totalorder %s24, 0
      %p80 = por %p78, %p79
      %p81 = scmp.ne.s32.totalorder %s69, %s70
      %p82 = scmp.eq.s32.totalorder %s25, 1
      %p83 = por %p81, %p82
      %p85 = scmp.ne.s32.totalorder %s70, %s84
      %p86 = scmp.eq.s32.totalorder %s25, 0
      %p87 = por %p85, %p86
      %s89 = sadd.s32 %s88, 1
      %p92 = scmp.eq.s32.totalorder %s19, 1
      %p93 = scmp.ne.s32.totalorder %s88, %s90
      %p94 = scmp.eq.s32.totalorder %s19, 0
      %p95 = por %p93, %p94
      %p96 = scmp.ne.s32.totalorder %s88, %s90
      %p97 = scmp.eq.s32.totalorder %s24, 1
      %p98 = por %p96, %p97
      %p99 = scmp.ne.s32.totalorder %s90, %s91
      %p100 = scmp.eq.s32.totalorder %s24, 0
      %p101 = por %p99, %p100
      %p102 = scmp.ne.s32.totalorder %s90, %s91
      %p103 = scmp.eq.s32.totalorder %s25, 1
      %p104 = por %p102, %p103
      %p106 = scmp.ne.s32.totalorder %s91, %s105
      %p107 = scmp.eq.s32.totalorder %s25, 0
      %p108 = por %p106, %p107
      %s109 = ssub.s32 %s27, %s34
      %p110 = scmp.eq.s32.totalorder %s109, 0
      %s112 = sadd.s32 %s111, 1
      %s113 = scalar_select %p110, %s111, %s112
      %p116 = pneg %p110
      %p117 = scmp.eq.s32.totalorder %s19, 1
      %p118 = por %p116, %p117
      %p119 = scmp.ne.s32.totalorder %s111, %s114
      %p120 = scmp.eq.s32.totalorder %s19, 0
      %p121 = por %p119, %p120
      %p122 = scmp.ne.s32.totalorder %s111, %s114
      %p123 = scmp.eq.s32.totalorder %s24, 1
      %p124 = por %p122, %p123
      %p125 = scmp.ne.s32.totalorder %s114, %s115
      %p126 = scmp.eq.s32.totalorder %s24, 0
      %p127 = por %p125, %p126
      %p128 = scmp.ne.s32.totalorder %s114, %s115
      %p129 = scmp.eq.s32.totalorder %s25, 1
      %p130 = por %p128, %p129
      %p132 = scmp.ne.s32.totalorder %s115, %s131
      %p133 = scmp.eq.s32.totalorder %s25, 0
      %p134 = por %p132, %p133
      %s135 = ssub.s32 %s27, %s34
      %p136 = scmp.eq.s32.totalorder %s135, 0
      %s138 = sadd.s32 %s137, 1
      %s139 = scalar_select %p136, %s137, %s138
      %p142 = pneg %p136
      %p143 = scmp.eq.s32.totalorder %s19, 1
      %p144 = por %p142, %p143
      %p145 = scmp.ne.s32.totalorder %s137, %s140
      %p146 = scmp.eq.s32.totalorder %s19, 0
      %p147 = por %p145, %p146
      %p148 = scmp.ne.s32.totalorder %s137, %s140
      %p149 = scmp.eq.s32.totalorder %s24, 1
      %p150 = por %p148, %p149
      %p151 = scmp.ne.s32.totalorder %s140, %s141
      %p152 = scmp.eq.s32.totalorder %s24, 0
      %p153 = por %p151, %p152
      %p154 = scmp.ne.s32.totalorder %s140, %s141
      %p155 = scmp.eq.s32.totalorder %s25, 1
      %p156 = por %p154, %p155
      %p158 = scmp.ne.s32.totalorder %s141, %s157
      %p159 = scmp.eq.s32.totalorder %s25, 0
      %p160 = por %p158, %p159
      %s161 = ssub.s32 %s26, %s38
      %s162 = ssub.s32 %s27, %s34
      %s163 = sor.u32 %s161, %s162
      %p164 = scmp.eq.s32.totalorder %s163, 0
      %s166 = sadd.s32 %s165, 1
      %s167 = scalar_select %p164, %s165, %s166
      %p170 = pneg %p164
      %p171 = scmp.eq.s32.totalorder %s19, 1
      %p172 = por %p170, %p171
      %p173 = scmp.ne.s32.totalorder %s165, %s168
      %p174 = scmp.eq.s32.totalorder %s19, 0
      %p175 = por %p173, %p174
      %p176 = scmp.ne.s32.totalorder %s165, %s168
      %p177 = scmp.eq.s32.totalorder %s24, 1
      %p178 = por %p176, %p177
      %p179 = scmp.ne.s32.totalorder %s168, %s169
      %p180 = scmp.eq.s32.totalorder %s24, 0
      %p181 = por %p179, %p180
      %p182 = scmp.ne.s32.totalorder %s168, %s169
      %p183 = scmp.eq.s32.totalorder %s25, 1
      %p184 = por %p182, %p183
      %p186 = scmp.ne.s32.totalorder %s169, %s185
      %p187 = scmp.eq.s32.totalorder %s25, 0
      %p188 = por %p186, %p187
      %p189 = scmp.le.s32.totalorder 1, %s19
      %p190 = scmp.lt.s32.totalorder %s19, 3
      %p191 = pnand %p189, %p190
      %p192 = pneg %p191
      // Predicated region
      $region9: #{tpu_custom_call.1} parent=5 // pred_check
        _
      $region10: #{tpu_custom_call.1} parent=5 // pred_check_branch
        %194 = sbr.rel (%p191) target = $region12
      $region11: #{tpu_custom_call.1} parent=5 // pred_region
        %s195 = ssub.s32 %s19, 1
        // Predicated region
        $region13: #{tpu_custom_call.1} parent=11 // pred_check
          %p196 = pneg %p80
        $region14: #{tpu_custom_call.1} parent=11 // pred_check_branch
          %198 = sbr.rel (%p196) target = $region16
        $region15: #{tpu_custom_call.1} parent=11 // pred_region
          %s200 = ssub.s32 4096, 4096
          %201 = vsyncadd [#allocation6], %s200
          %s202 = sshll.u32 [#allocation5], 4
          %s203 = int_to_ptr.vmem [resolvable:$true] %s202
          %208 = dma.hbm_to_vmem [thread:$0]  %s1, 4096, %s203, [#allocation6], 128, 128, 8
        $region16: #{tpu_custom_call.1} parent=11 // pred_fallthru
          _
        // Predicated region
        $region17: #{tpu_custom_call.1} parent=11 // pred_check
          %p209 = pneg %p101
        $region18: #{tpu_custom_call.1} parent=11 // pred_check_branch
          %211 = sbr.rel (%p209) target = $region20
        $region19: #{tpu_custom_call.1} parent=11 // pred_region
          _
        $region20: #{tpu_custom_call.1} parent=11 // pred_fallthru
          _
        // Predicated region
        $region21: #{tpu_custom_call.1} parent=11 // pred_check
          %p212 = pneg %p127
        $region22: #{tpu_custom_call.1} parent=11 // pred_check_branch
          %214 = sbr.rel (%p212) target = $region24
        $region23: #{tpu_custom_call.1} parent=11 // pred_region
          %s215 = smul.u32 64, %s29
          %s217 = ssub.s32 8192, 8192
          %218 = vsyncadd [#allocation6], %s217
          %s219 = smul.addr %s215, 128
          %s220 = scalar_lea.hbm %s3, %s219
          %s221 = sshll.u32 [#allocation7], 4
          %s222 = int_to_ptr.vmem [resolvable:$true] %s221
          %227 = dma.hbm_to_vmem [thread:$0]  %s220, 8192, %s222, [#allocation6], 128, 128, 8
        $region24: #{tpu_custom_call.1} parent=11 // pred_fallthru
          _
        // Predicated region
        $region25: #{tpu_custom_call.1} parent=11 // pred_check
          %p228 = pneg %p153
        $region26: #{tpu_custom_call.1} parent=11 // pred_check_branch
          %230 = sbr.rel (%p228) target = $region28
        $region27: #{tpu_custom_call.1} parent=11 // pred_region
          %s231 = smul.u32 64, %s29
          %s233 = ssub.s32 8192, 8192
          %234 = vsyncadd [#allocation9], %s233
          %s235 = smul.addr %s231, 128
          %s236 = scalar_lea.hbm %s4, %s235
          %s237 = sshll.u32 [#allocation8], 4
          %s238 = int_to_ptr.vmem [resolvable:$true] %s237
          %243 = dma.hbm_to_vmem [thread:$0]  %s236, 8192, %s238, [#allocation9], 128, 128, 8
        $region28: #{tpu_custom_call.1} parent=11 // pred_fallthru
          _
      $region12: #{tpu_custom_call.1} parent=5 // pred_fallthru
        _
      %p244 = scmp.lt.s32.totalorder %s19, 2
      // Predicated region
      $region29: #{tpu_custom_call.1} parent=5 // pred_check
        %p245 = pneg %p244
      $region30: #{tpu_custom_call.1} parent=5 // pred_check_branch
        %247 = sbr.rel (%p245) target = $region32
      $region31: #{tpu_custom_call.1} parent=5 // pred_region
        // Predicated region
        $region33: #{tpu_custom_call.1} parent=31 // pred_check
          %p248 = pneg %p53
        $region34: #{tpu_custom_call.1} parent=31 // pred_check_branch
          %250 = sbr.rel (%p248) target = $region36
        $region35: #{tpu_custom_call.1} parent=31 // pred_region
          %s251 = sand.u32 %s43, 1
          %s252 = scalar_lea.sflag [#allocation3], %s251
          %s253 = sand.u32 %s43, 1
          %s254 = smul.addr %s253, 512
          %s255 = scalar_lea.vmem [#allocation2], %s254
          %s256 = smul.u32 64, %s27
          %s258 = ssub.s32 8192, 8192
          %259 = vsyncadd %s252, %s258
          %s260 = smul.addr %s256, 2
          %s261 = smul.addr %s26, 128
          %s262 = sadd.s32 %s260, %s261
          %s263 = smul.addr %s262, 64
          %s264 = scalar_lea.hbm %s0, %s263
          %s265 = sshll.u32 %s255, 4
          %s266 = int_to_ptr.vmem [resolvable:$true] %s265
          %271 = dma.hbm_to_vmem [thread:$0]  %s264, 8192, %s266, %s252, 128, 128, 8
        $region36: #{tpu_custom_call.1} parent=31 // pred_fallthru
          _
      $region32: #{tpu_custom_call.1} parent=5 // pred_fallthru
        _
      %p272 = scmp.le.s32.totalorder 1, %s19
      %p273 = scmp.lt.s32.totalorder %s19, 3
      %p274 = pnand %p272, %p273
      %p275 = pneg %p274
      // Predicated region
      $region37: #{tpu_custom_call.1} parent=5 // pred_check
        _
      $region38: #{tpu_custom_call.1} parent=5 // pred_check_branch
        %277 = sbr.rel (%p274) target = $region40
      $region39: #{tpu_custom_call.1} parent=5 // pred_region
        %s278 = ssub.s32 %s19, 1
        %s279 = sand.u32 %s46, 1
        %s280 = scalar_lea.sflag [#allocation3], %s279
        %s281 = sand.u32 %s46, 1
        %s282 = smul.addr %s281, 512
        %s283 = scalar_lea.vmem [#allocation2], %s282
        // Predicated region
        $region41: #{tpu_custom_call.1} parent=39 // pred_check
          %p284 = pneg %p59
        $region42: #{tpu_custom_call.1} parent=39 // pred_check_branch
          %286 = sbr.rel (%p284) target = $region44
        $region43: #{tpu_custom_call.1} parent=39 // pred_region
          %287 = dma.done %s280, 8192
        $region44: #{tpu_custom_call.1} parent=39 // pred_fallthru
          _
        // Predicated region
        $region45: #{tpu_custom_call.1} parent=39 // pred_check
          %p288 = pneg %p80
        $region46: #{tpu_custom_call.1} parent=39 // pred_check_branch
          %290 = sbr.rel (%p288) target = $region48
        $region47: #{tpu_custom_call.1} parent=39 // pred_region
          %291 = dma.done [#allocation6], 4096
        $region48: #{tpu_custom_call.1} parent=39 // pred_fallthru
          _
        // Predicated region
        $region49: #{tpu_custom_call.1} parent=39 // pred_check
          %p292 = pneg %p127
        $region50: #{tpu_custom_call.1} parent=39 // pred_check_branch
          %294 = sbr.rel (%p292) target = $region52
        $region51: #{tpu_custom_call.1} parent=39 // pred_region
          %295 = dma.done [#allocation6], 8192
        $region52: #{tpu_custom_call.1} parent=39 // pred_fallthru
          _
        // Predicated region
        $region53: #{tpu_custom_call.1} parent=39 // pred_check
          %p296 = pneg %p153
        $region54: #{tpu_custom_call.1} parent=39 // pred_check_branch
          %298 = sbr.rel (%p296) target = $region56
        $region55: #{tpu_custom_call.1} parent=39 // pred_region
          %299 = dma.done [#allocation9], 8192
        $region56: #{tpu_custom_call.1} parent=39 // pred_fallthru
          _
        %s300 = sand.u32 %s46, 1
        %s301 = scalar_lea.sflag [#allocation3], %s300
        %s302 = sand.u32 %s46, 1
        %s303 = smul.addr %s302, 512
        %s304 = scalar_lea.vmem [#allocation2], %s303
        %p305 = pneg %p59
        %p306 = pneg %p56
        %p307 = pneg %p80
        %p308 = pneg %p77
        %p309 = pneg %p101
        %p310 = pneg %p98
        %p311 = pneg %p127
        %p312 = pneg %p124
        %p313 = pneg %p153
        %p314 = pneg %p150
        %p315 = pneg %p181
        %p316 = pneg %p178
        %s317 = sand.u32 %s168, 1
        %s318 = scalar_lea.sflag [#allocation4], %s317
        %s319 = sand.u32 %s168, 1
        %s320 = smul.addr %s319, 512
        %s321 = scalar_lea.vmem [#allocation10], %s320
        %s322 = smul.u32 64, %s29
        %s323 = smul.u32 64, %s29
        %s324 = smul.u32 64, %s29
        %s325 = smul.u32 64, %s29
        %v326 = vld [vmem:[%s283] sm:$0xff]
        %v327 = vld [vmem:[%s283 + $0x8] sm:$0xff]
        %v328 = vld [vmem:[%s283 + $0x10] sm:$0xff]
        %v329 = vld [vmem:[%s283 + $0x18] sm:$0xff]
        %v330 = vld [vmem:[%s283 + $0x20] sm:$0xff]
        %v331 = vld [vmem:[%s283 + $0x28] sm:$0xff]
        %v332 = vld [vmem:[%s283 + $0x30] sm:$0xff]
        %v333 = vld [vmem:[%s283 + $0x38] sm:$0xff]
        %v334 = vld [vmem:[%s283 + $0x40] sm:$0xff]
        %v335 = vld [vmem:[%s283 + $0x48] sm:$0xff]
        %v336 = vld [vmem:[%s283 + $0x50] sm:$0xff]
        %v337 = vld [vmem:[%s283 + $0x58] sm:$0xff]
        %v338 = vld [vmem:[%s283 + $0x60] sm:$0xff]
        %v339 = vld [vmem:[%s283 + $0x68] sm:$0xff]
        %v340 = vld [vmem:[%s283 + $0x70] sm:$0xff]
        %v341 = vld [vmem:[%s283 + $0x78] sm:$0xff]
        %v342 = vld [vmem:[%s283 + $0x80] sm:$0xff]
        %v343 = vld [vmem:[%s283 + $0x88] sm:$0xff]
        %v344 = vld [vmem:[%s283 + $0x90] sm:$0xff]
        %v345 = vld [vmem:[%s283 + $0x98] sm:$0xff]
        %v346 = vld [vmem:[%s283 + $0xa0] sm:$0xff]
        %v347 = vld [vmem:[%s283 + $0xa8] sm:$0xff]
        %v348 = vld [vmem:[%s283 + $0xb0] sm:$0xff]
        %v349 = vld [vmem:[%s283 + $0xb8] sm:$0xff]
        %v350 = vld [vmem:[%s283 + $0xc0] sm:$0xff]
        %v351 = vld [vmem:[%s283 + $0xc8] sm:$0xff]
        %v352 = vld [vmem:[%s283 + $0xd0] sm:$0xff]
        %v353 = vld [vmem:[%s283 + $0xd8] sm:$0xff]
        %v354 = vld [vmem:[%s283 + $0xe0] sm:$0xff]
        %v355 = vld [vmem:[%s283 + $0xe8] sm:$0xff]
        %v356 = vld [vmem:[%s283 + $0xf0] sm:$0xff]
        %v357 = vld [vmem:[%s283 + $0xf8] sm:$0xff]
        %v358 = vld [vmem:[%s283 + $0x100] sm:$0xff]
        %v359 = vld [vmem:[%s283 + $0x108] sm:$0xff]
        %v360 = vld [vmem:[%s283 + $0x110] sm:$0xff]
        %v361 = vld [vmem:[%s283 + $0x118] sm:$0xff]
        %v362 = vld [vmem:[%s283 + $0x120] sm:$0xff]
        %v363 = vld [vmem:[%s283 + $0x128] sm:$0xff]
        %v364 = vld [vmem:[%s283 + $0x130] sm:$0xff]
        %v365 = vld [vmem:[%s283 + $0x138] sm:$0xff]
        %v366 = vld [vmem:[%s283 + $0x140] sm:$0xff]
        %v367 = vld [vmem:[%s283 + $0x148] sm:$0xff]
        %v368 = vld [vmem:[%s283 + $0x150] sm:$0xff]
        %v369 = vld [vmem:[%s283 + $0x158] sm:$0xff]
        %v370 = vld [vmem:[%s283 + $0x160] sm:$0xff]
        %v371 = vld [vmem:[%s283 + $0x168] sm:$0xff]
        %v372 = vld [vmem:[%s283 + $0x170] sm:$0xff]
        %v373 = vld [vmem:[%s283 + $0x178] sm:$0xff]
        %v374 = vld [vmem:[%s283 + $0x180] sm:$0xff]
        %v375 = vld [vmem:[%s283 + $0x188] sm:$0xff]
        %v376 = vld [vmem:[%s283 + $0x190] sm:$0xff]
        %v377 = vld [vmem:[%s283 + $0x198] sm:$0xff]
        %v378 = vld [vmem:[%s283 + $0x1a0] sm:$0xff]
        %v379 = vld [vmem:[%s283 + $0x1a8] sm:$0xff]
        %v380 = vld [vmem:[%s283 + $0x1b0] sm:$0xff]
        %v381 = vld [vmem:[%s283 + $0x1b8] sm:$0xff]
        %v382 = vld [vmem:[%s283 + $0x1c0] sm:$0xff]
        %v383 = vld [vmem:[%s283 + $0x1c8] sm:$0xff]
        %v384 = vld [vmem:[%s283 + $0x1d0] sm:$0xff]
        %v385 = vld [vmem:[%s283 + $0x1d8] sm:$0xff]
        %v386 = vld [vmem:[%s283 + $0x1e0] sm:$0xff]
        %v387 = vld [vmem:[%s283 + $0x1e8] sm:$0xff]
        %v388 = vld [vmem:[%s283 + $0x1f0] sm:$0xff]
        %v389 = vld [vmem:[%s283 + $0x1f8] sm:$0xff]
        %v390 = vld [vmem:[#allocation5] sm:$0xff]
        %v391 = vld [vmem:[#allocation5 + $0x8] sm:$0xff]
        %v392 = vld [vmem:[#allocation5 + $0x10] sm:$0xff]
        %v393 = vld [vmem:[#allocation5 + $0x18] sm:$0xff]
        %v394 = vld [vmem:[#allocation5 + $0x20] sm:$0xff]
        %v395 = vld [vmem:[#allocation5 + $0x28] sm:$0xff]
        %v396 = vld [vmem:[#allocation5 + $0x30] sm:$0xff]
        %v397 = vld [vmem:[#allocation5 + $0x38] sm:$0xff]
        %v398 = vld [vmem:[#allocation5 + $0x40] sm:$0xff]
        %v399 = vld [vmem:[#allocation5 + $0x48] sm:$0xff]
        %v400 = vld [vmem:[#allocation5 + $0x50] sm:$0xff]
        %v401 = vld [vmem:[#allocation5 + $0x58] sm:$0xff]
        %v402 = vld [vmem:[#allocation5 + $0x60] sm:$0xff]
        %v403 = vld [vmem:[#allocation5 + $0x68] sm:$0xff]
        %v404 = vld [vmem:[#allocation5 + $0x70] sm:$0xff]
        %v405 = vld [vmem:[#allocation5 + $0x78] sm:$0xff]
        %v406 = vld [vmem:[#allocation5 + $0x80] sm:$0xff]
        %v407 = vld [vmem:[#allocation5 + $0x88] sm:$0xff]
        %v408 = vld [vmem:[#allocation5 + $0x90] sm:$0xff]
        %v409 = vld [vmem:[#allocation5 + $0x98] sm:$0xff]
        %v410 = vld [vmem:[#allocation5 + $0xa0] sm:$0xff]
        %v411 = vld [vmem:[#allocation5 + $0xa8] sm:$0xff]
        %v412 = vld [vmem:[#allocation5 + $0xb0] sm:$0xff]
        %v413 = vld [vmem:[#allocation5 + $0xb8] sm:$0xff]
        %v414 = vld [vmem:[#allocation5 + $0xc0] sm:$0xff]
        %v415 = vld [vmem:[#allocation5 + $0xc8] sm:$0xff]
        %v416 = vld [vmem:[#allocation5 + $0xd0] sm:$0xff]
        %v417 = vld [vmem:[#allocation5 + $0xd8] sm:$0xff]
        %v418 = vld [vmem:[#allocation5 + $0xe0] sm:$0xff]
        %v419 = vld [vmem:[#allocation5 + $0xe8] sm:$0xff]
        %v420 = vld [vmem:[#allocation5 + $0xf0] sm:$0xff]
        %v421 = vld [vmem:[#allocation5 + $0xf8] sm:$0xff]
        %v422 = vld [vmem:[%s2] sm:$0x3]
        %v424 = vlaneseq
        %v425 = vshrl.u32 %v424, 7
        %v426 = vsub.s32 0, %v425
        %v427 = vrot.slane %v422, %v426
        %v428 = vlaneseq
        %v429 = vshrl.u32 %v428, 7
        %v430 = vsub.s32 1, %v429
        %v431 = vrot.slane %v422, %v430
        %v498 = vunpack.c.l.b16 %v326
        %v499 = vunpack.c.h.b16 %v326
        %v500 = vunpack.c.l.b16 %v327
        %v501 = vunpack.c.h.b16 %v327
        %v502 = vunpack.c.l.b16 %v328
        %v503 = vunpack.c.h.b16 %v328
        %v504 = vunpack.c.l.b16 %v329
        %v505 = vunpack.c.h.b16 %v329
        %v506 = vunpack.c.l.b16 %v330
        %v507 = vunpack.c.h.b16 %v330
        %v508 = vunpack.c.l.b16 %v331
        %v509 = vunpack.c.h.b16 %v331
        %v510 = vunpack.c.l.b16 %v332
        %v511 = vunpack.c.h.b16 %v332
        %v512 = vunpack.c.l.b16 %v333
        %v513 = vunpack.c.h.b16 %v333
        %v514 = vunpack.c.l.b16 %v334
        %v515 = vunpack.c.h.b16 %v334
        %v516 = vunpack.c.l.b16 %v335
        %v517 = vunpack.c.h.b16 %v335
        %v518 = vunpack.c.l.b16 %v336
        %v519 = vunpack.c.h.b16 %v336
        %v520 = vunpack.c.l.b16 %v337
        %v521 = vunpack.c.h.b16 %v337
        %v522 = vunpack.c.l.b16 %v338
        %v523 = vunpack.c.h.b16 %v338
        %v524 = vunpack.c.l.b16 %v339
        %v525 = vunpack.c.h.b16 %v339
        %v526 = vunpack.c.l.b16 %v340
        %v527 = vunpack.c.h.b16 %v340
        %v528 = vunpack.c.l.b16 %v341
        %v529 = vunpack.c.h.b16 %v341
        %v530 = vunpack.c.l.b16 %v342
        %v531 = vunpack.c.h.b16 %v342
        %v532 = vunpack.c.l.b16 %v343
        %v533 = vunpack.c.h.b16 %v343
        %v534 = vunpack.c.l.b16 %v344
        %v535 = vunpack.c.h.b16 %v344
        %v536 = vunpack.c.l.b16 %v345
        %v537 = vunpack.c.h.b16 %v345
        %v538 = vunpack.c.l.b16 %v346
        %v539 = vunpack.c.h.b16 %v346
        %v540 = vunpack.c.l.b16 %v347
        %v541 = vunpack.c.h.b16 %v347
        %v542 = vunpack.c.l.b16 %v348
        %v543 = vunpack.c.h.b16 %v348
        %v544 = vunpack.c.l.b16 %v349
        %v545 = vunpack.c.h.b16 %v349
        %v546 = vunpack.c.l.b16 %v350
        %v547 = vunpack.c.h.b16 %v350
        %v548 = vunpack.c.l.b16 %v351
        %v549 = vunpack.c.h.b16 %v351
        %v550 = vunpack.c.l.b16 %v352
        %v551 = vunpack.c.h.b16 %v352
        %v552 = vunpack.c.l.b16 %v353
        %v553 = vunpack.c.h.b16 %v353
        %v554 = vunpack.c.l.b16 %v354
        %v555 = vunpack.c.h.b16 %v354
        %v556 = vunpack.c.l.b16 %v355
        %v557 = vunpack.c.h.b16 %v355
        %v558 = vunpack.c.l.b16 %v356
        %v559 = vunpack.c.h.b16 %v356
        %v560 = vunpack.c.l.b16 %v357
        %v561 = vunpack.c.h.b16 %v357
        %v562 = vunpack.c.l.b16 %v358
        %v563 = vunpack.c.h.b16 %v358
        %v564 = vunpack.c.l.b16 %v359
        %v565 = vunpack.c.h.b16 %v359
        %v566 = vunpack.c.l.b16 %v360
        %v567 = vunpack.c.h.b16 %v360
        %v568 = vunpack.c.l.b16 %v361
        %v569 = vunpack.c.h.b16 %v361
        %v570 = vunpack.c.l.b16 %v362
        %v571 = vunpack.c.h.b16 %v362
        %v572 = vunpack.c.l.b16 %v363
        %v573 = vunpack.c.h.b16 %v363
        %v574 = vunpack.c.l.b16 %v364
        %v575 = vunpack.c.h.b16 %v364
        %v576 = vunpack.c.l.b16 %v365
        %v577 = vunpack.c.h.b16 %v365
        %v578 = vunpack.c.l.b16 %v366
        %v579 = vunpack.c.h.b16 %v366
        %v580 = vunpack.c.l.b16 %v367
        %v581 = vunpack.c.h.b16 %v367
        %v582 = vunpack.c.l.b16 %v368
        %v583 = vunpack.c.h.b16 %v368
        %v584 = vunpack.c.l.b16 %v369
        %v585 = vunpack.c.h.b16 %v369
        %v586 = vunpack.c.l.b16 %v370
        %v587 = vunpack.c.h.b16 %v370
        %v588 = vunpack.c.l.b16 %v371
        %v589 = vunpack.c.h.b16 %v371
        %v590 = vunpack.c.l.b16 %v372
        %v591 = vunpack.c.h.b16 %v372
        %v592 = vunpack.c.l.b16 %v373
        %v593 = vunpack.c.h.b16 %v373
        %v594 = vunpack.c.l.b16 %v374
        %v595 = vunpack.c.h.b16 %v374
        %v596 = vunpack.c.l.b16 %v375
        %v597 = vunpack.c.h.b16 %v375
        %v598 = vunpack.c.l.b16 %v376
        %v599 = vunpack.c.h.b16 %v376
        %v600 = vunpack.c.l.b16 %v377
        %v601 = vunpack.c.h.b16 %v377
        %v602 = vunpack.c.l.b16 %v378
        %v603 = vunpack.c.h.b16 %v378
        %v604 = vunpack.c.l.b16 %v379
        %v605 = vunpack.c.h.b16 %v379
        %v606 = vunpack.c.l.b16 %v380
        %v607 = vunpack.c.h.b16 %v380
        %v608 = vunpack.c.l.b16 %v381
        %v609 = vunpack.c.h.b16 %v381
        %v610 = vunpack.c.l.b16 %v382
        %v611 = vunpack.c.h.b16 %v382
        %v612 = vunpack.c.l.b16 %v383
        %v613 = vunpack.c.h.b16 %v383
        %v614 = vunpack.c.l.b16 %v384
        %v615 = vunpack.c.h.b16 %v384
        %v616 = vunpack.c.l.b16 %v385
        %v617 = vunpack.c.h.b16 %v385
        %v618 = vunpack.c.l.b16 %v386
        %v619 = vunpack.c.h.b16 %v386
        %v620 = vunpack.c.l.b16 %v387
        %v621 = vunpack.c.h.b16 %v387
        %v622 = vunpack.c.l.b16 %v388
        %v623 = vunpack.c.h.b16 %v388
        %v624 = vunpack.c.l.b16 %v389
        %v625 = vunpack.c.h.b16 %v389
        %v626 = vpack.c.b16 %v500, %v498
        %v627 = vpack.c.b16 %v501, %v499
        %v628 = vpack.c.b16 %v504, %v502
        %v629 = vpack.c.b16 %v505, %v503
        %v630 = vpack.c.b16 %v508, %v506
        %v631 = vpack.c.b16 %v509, %v507
        %v632 = vpack.c.b16 %v512, %v510
        %v633 = vpack.c.b16 %v513, %v511
        %v634 = vpack.c.b16 %v516, %v514
        %v635 = vpack.c.b16 %v517, %v515
        %v636 = vpack.c.b16 %v520, %v518
        %v637 = vpack.c.b16 %v521, %v519
        %v638 = vpack.c.b16 %v524, %v522
        %v639 = vpack.c.b16 %v525, %v523
        %v640 = vpack.c.b16 %v528, %v526
        %v641 = vpack.c.b16 %v529, %v527
        %v642 = vpack.c.b16 %v532, %v530
        %v643 = vpack.c.b16 %v533, %v531
        %v644 = vpack.c.b16 %v536, %v534
        %v645 = vpack.c.b16 %v537, %v535
        %v646 = vpack.c.b16 %v540, %v538
        %v647 = vpack.c.b16 %v541, %v539
        %v648 = vpack.c.b16 %v544, %v542
        %v649 = vpack.c.b16 %v545, %v543
        %v650 = vpack.c.b16 %v548, %v546
        %v651 = vpack.c.b16 %v549, %v547
        %v652 = vpack.c.b16 %v552, %v550
        %v653 = vpack.c.b16 %v553, %v551
        %v654 = vpack.c.b16 %v556, %v554
        %v655 = vpack.c.b16 %v557, %v555
        %v656 = vpack.c.b16 %v560, %v558
        %v657 = vpack.c.b16 %v561, %v559
        %v658 = vpack.c.b16 %v564, %v562
        %v659 = vpack.c.b16 %v565, %v563
        %v660 = vpack.c.b16 %v568, %v566
        %v661 = vpack.c.b16 %v569, %v567
        %v662 = vpack.c.b16 %v572, %v570
        %v663 = vpack.c.b16 %v573, %v571
        %v664 = vpack.c.b16 %v576, %v574
        %v665 = vpack.c.b16 %v577, %v575
        %v666 = vpack.c.b16 %v580, %v578
        %v667 = vpack.c.b16 %v581, %v579
        %v668 = vpack.c.b16 %v584, %v582
        %v669 = vpack.c.b16 %v585, %v583
        %v670 = vpack.c.b16 %v588, %v586
        %v671 = vpack.c.b16 %v589, %v587
        %v672 = vpack.c.b16 %v592, %v590
        %v673 = vpack.c.b16 %v593, %v591
        %v674 = vpack.c.b16 %v596, %v594
        %v675 = vpack.c.b16 %v597, %v595
        %v676 = vpack.c.b16 %v600, %v598
        %v677 = vpack.c.b16 %v601, %v599
        %v678 = vpack.c.b16 %v604, %v602
        %v679 = vpack.c.b16 %v605, %v603
        %v680 = vpack.c.b16 %v608, %v606
        %v681 = vpack.c.b16 %v609, %v607
        %v682 = vpack.c.b16 %v612, %v610
        %v683 = vpack.c.b16 %v613, %v611
        %v684 = vpack.c.b16 %v616, %v614
        %v685 = vpack.c.b16 %v617, %v615
        %v686 = vpack.c.b16 %v620, %v618
        %v687 = vpack.c.b16 %v621, %v619
        %v688 = vpack.c.b16 %v624, %v622
        %v689 = vpack.c.b16 %v625, %v623
        %v786 = vunpack.c.l.b16 %v390
        %v787 = vunpack.c.h.b16 %v390
        %v788 = vunpack.c.l.b16 %v391
        %v789 = vunpack.c.h.b16 %v391
        %v790 = vunpack.c.l.b16 %v392
        %v791 = vunpack.c.h.b16 %v392
        %v792 = vunpack.c.l.b16 %v393
        %v793 = vunpack.c.h.b16 %v393
        %v794 = vunpack.c.l.b16 %v394
        %v795 = vunpack.c.h.b16 %v394
        %v796 = vunpack.c.l.b16 %v395
        %v797 = vunpack.c.h.b16 %v395
        %v798 = vunpack.c.l.b16 %v396
        %v799 = vunpack.c.h.b16 %v396
        %v800 = vunpack.c.l.b16 %v397
        %v801 = vunpack.c.h.b16 %v397
        %v802 = vunpack.c.l.b16 %v398
        %v803 = vunpack.c.h.b16 %v398
        %v804 = vunpack.c.l.b16 %v399
        %v805 = vunpack.c.h.b16 %v399
        %v806 = vunpack.c.l.b16 %v400
        %v807 = vunpack.c.h.b16 %v400
        %v808 = vunpack.c.l.b16 %v401
        %v809 = vunpack.c.h.b16 %v401
        %v810 = vunpack.c.l.b16 %v402
        %v811 = vunpack.c.h.b16 %v402
        %v812 = vunpack.c.l.b16 %v403
        %v813 = vunpack.c.h.b16 %v403
        %v814 = vunpack.c.l.b16 %v404
        %v815 = vunpack.c.h.b16 %v404
        %v816 = vunpack.c.l.b16 %v405
        %v817 = vunpack.c.h.b16 %v405
        %v818 = vunpack.c.l.b16 %v406
        %v819 = vunpack.c.h.b16 %v406
        %v820 = vunpack.c.l.b16 %v407
        %v821 = vunpack.c.h.b16 %v407
        %v822 = vunpack.c.l.b16 %v408
        %v823 = vunpack.c.h.b16 %v408
        %v824 = vunpack.c.l.b16 %v409
        %v825 = vunpack.c.h.b16 %v409
        %v826 = vunpack.c.l.b16 %v410
        %v827 = vunpack.c.h.b16 %v410
        %v828 = vunpack.c.l.b16 %v411
        %v829 = vunpack.c.h.b16 %v411
        %v830 = vunpack.c.l.b16 %v412
        %v831 = vunpack.c.h.b16 %v412
        %v832 = vunpack.c.l.b16 %v413
        %v833 = vunpack.c.h.b16 %v413
        %v834 = vunpack.c.l.b16 %v414
        %v835 = vunpack.c.h.b16 %v414
        %v836 = vunpack.c.l.b16 %v415
        %v837 = vunpack.c.h.b16 %v415
        %v838 = vunpack.c.l.b16 %v416
        %v839 = vunpack.c.h.b16 %v416
        %v840 = vunpack.c.l.b16 %v417
        %v841 = vunpack.c.h.b16 %v417
        %v842 = vunpack.c.l.b16 %v418
        %v843 = vunpack.c.h.b16 %v418
        %v844 = vunpack.c.l.b16 %v419
        %v845 = vunpack.c.h.b16 %v419
        %v846 = vunpack.c.l.b16 %v420
        %v847 = vunpack.c.h.b16 %v420
        %v848 = vunpack.c.l.b16 %v421
        %v849 = vunpack.c.h.b16 %v421
        %v850 = vpack.c.b16 %v788, %v786
        %v851 = vpack.c.b16 %v789, %v787
        %v852 = vpack.c.b16 %v792, %v790
        %v853 = vpack.c.b16 %v793, %v791
        %v854 = vpack.c.b16 %v796, %v794
        %v855 = vpack.c.b16 %v797, %v795
        %v856 = vpack.c.b16 %v800, %v798
        %v857 = vpack.c.b16 %v801, %v799
        %v858 = vpack.c.b16 %v804, %v802
        %v859 = vpack.c.b16 %v805, %v803
        %v860 = vpack.c.b16 %v808, %v806
        %v861 = vpack.c.b16 %v809, %v807
        %v862 = vpack.c.b16 %v812, %v810
        %v863 = vpack.c.b16 %v813, %v811
        %v864 = vpack.c.b16 %v816, %v814
        %v865 = vpack.c.b16 %v817, %v815
        %v866 = vpack.c.b16 %v820, %v818
        %v867 = vpack.c.b16 %v821, %v819
        %v868 = vpack.c.b16 %v824, %v822
        %v869 = vpack.c.b16 %v825, %v823
        %v870 = vpack.c.b16 %v828, %v826
        %v871 = vpack.c.b16 %v829, %v827
        %v872 = vpack.c.b16 %v832, %v830
        %v873 = vpack.c.b16 %v833, %v831
        %v874 = vpack.c.b16 %v836, %v834
        %v875 = vpack.c.b16 %v837, %v835
        %v876 = vpack.c.b16 %v840, %v838
        %v877 = vpack.c.b16 %v841, %v839
        %v878 = vpack.c.b16 %v844, %v842
        %v879 = vpack.c.b16 %v845, %v843
        %v880 = vpack.c.b16 %v848, %v846
        %v881 = vpack.c.b16 %v849, %v847
        %914 = vmatprep.subr.bf16.mxu0 %v851
        %915 = vmatpush1.bf16.msra.mxu0 %v850
        %916 = vmatprep.subr.bf16.mxu0 %v853
        %917 = vmatpush1.bf16.msra.mxu0 %v852
        %918 = vmatprep.subr.bf16.mxu0 %v855
        %919 = vmatpush1.bf16.msra.mxu0 %v854
        %920 = vmatprep.subr.bf16.mxu0 %v857
        %921 = vmatpush1.bf16.msra.mxu0 %v856
        %922 = vmatprep.subr.bf16.mxu0 %v859
        %923 = vmatpush1.bf16.msra.mxu0 %v858
        %924 = vmatprep.subr.bf16.mxu0 %v861
        %925 = vmatpush1.bf16.msra.mxu0 %v860
        %926 = vmatprep.subr.bf16.mxu0 %v863
        %927 = vmatpush1.bf16.msra.mxu0 %v862
        %928 = vmatprep.subr.bf16.mxu0 %v865
        %929 = vmatpush1.bf16.msra.mxu0 %v864
        %930 = vmatprep.subr.bf16.mxu0 %v867
        %931 = vmatpush1.bf16.msra.mxu0 %v866
        %932 = vmatprep.subr.bf16.mxu0 %v869
        %933 = vmatpush1.bf16.msra.mxu0 %v868
        %934 = vmatprep.subr.bf16.mxu0 %v871
        %935 = vmatpush1.bf16.msra.mxu0 %v870
        %936 = vmatprep.subr.bf16.mxu0 %v873
        %937 = vmatpush1.bf16.msra.mxu0 %v872
        %938 = vmatprep.subr.bf16.mxu0 %v875
        %939 = vmatpush1.bf16.msra.mxu0 %v874
        %940 = vmatprep.subr.bf16.mxu0 %v877
        %941 = vmatpush1.bf16.msra.mxu0 %v876
        %942 = vmatprep.subr.bf16.mxu0 %v879
        %943 = vmatpush1.bf16.msra.mxu0 %v878
        %944 = vmatprep.subr.bf16.mxu0 %v881
        %945 = vmatpush1.bf16.msra.mxu0 %v880
        %946 = vmatprep.mubr.bf16.mxu0 %v627
        %947 = vmatmul.mubr.bf16.gmra.mrb[0].mxu0 %v626
        %v948 = vpop.f32.mrb[0].mxu0
        %v949 = vadd.f32 %v427, %v948
        %v950 = vpop.f32.mrb[0].mxu0
        %v951 = vadd.f32 %v431, %v950
        %v952 = vpop.f32.mrb[0].mxu0
        %v953 = vadd.f32 %v427, %v952
        %v954 = vpop.f32.mrb[0].mxu0
        %v955 = vadd.f32 %v431, %v954
        %956 = vmatprep.mubr.bf16.mxu0 %v629
        %957 = vmatmul.mubr.bf16.gmra.mrb[0].mxu0 %v628
        %v958 = vpop.f32.mrb[0].mxu0
        %v959 = vadd.f32 %v427, %v958
        %v960 = vpop.f32.mrb[0].mxu0
        %v961 = vadd.f32 %v431, %v960
        %v962 = vpop.f32.mrb[0].mxu0
        %v963 = vadd.f32 %v427, %v962
        %v964 = vpop.f32.mrb[0].mxu0
        %v965 = vadd.f32 %v431, %v964
        %966 = vmatprep.mubr.bf16.mxu0 %v631
        %967 = vmatmul.mubr.bf16.gmra.mrb[0].mxu0 %v630
        %v968 = vpop.f32.mrb[0].mxu0
        %v969 = vadd.f32 %v427, %v968
        %v970 = vpop.f32.mrb[0].mxu0
        %v971 = vadd.f32 %v431, %v970
        %v972 = vpop.f32.mrb[0].mxu0
        %v973 = vadd.f32 %v427, %v972
        %v974 = vpop.f32.mrb[0].mxu0
        %v975 = vadd.f32 %v431, %v974
        %976 = vmatprep.mubr.bf16.mxu0 %v633
        %977 = vmatmul.mubr.bf16.gmra.mrb[0].mxu0 %v632
        %v978 = vpop.f32.mrb[0].mxu0
        %v979 = vadd.f32 %v427, %v978
        %v980 = vpop.f32.mrb[0].mxu0
        %v981 = vadd.f32 %v431, %v980
        %v982 = vpop.f32.mrb[0].mxu0
        %v983 = vadd.f32 %v427, %v982
        %v984 = vpop.f32.mrb[0].mxu0
        %v985 = vadd.f32 %v431, %v984
        %986 = vmatprep.mubr.bf16.mxu0 %v635
        %987 = vmatmul.mubr.bf16.gmra.mrb[0].mxu0 %v634
        %v988 = vpop.f32.mrb[0].mxu0
        %v989 = vadd.f32 %v427, %v988
        %v990 = vpop.f32.mrb[0].mxu0
        %v991 = vadd.f32 %v431, %v990
        %v992 = vpop.f32.mrb[0].mxu0
        %v993 = vadd.f32 %v427, %v992
        %v994 = vpop.f32.mrb[0].mxu0
        %v995 = vadd.f32 %v431, %v994
        %996 = vmatprep.mubr.bf16.mxu0 %v637
        %997 = vmatmul.mubr.bf16.gmra.mrb[0].mxu0 %v636
        %v998 = vpop.f32.mrb[0].mxu0
        %v999 = vadd.f32 %v427, %v998
        %v1000 = vpop.f32.mrb[0].mxu0
        %v1001 = vadd.f32 %v431, %v1000
        %v1002 = vpop.f32.mrb[0].mxu0
        %v1003 = vadd.f32 %v427, %v1002
        %v1004 = vpop.f32.mrb[0].mxu0
        %v1005 = vadd.f32 %v431, %v1004
        %1006 = vmatprep.mubr.bf16.mxu0 %v639
        %1007 = vmatmul.mubr.bf16.gmra.mrb[0].mxu0 %v638
        %v1008 = vpop.f32.mrb[0].mxu0
        %v1009 = vadd.f32 %v427, %v1008
        %v1010 = vpop.f32.mrb[0].mxu0
        %v1011 = vadd.f32 %v431, %v1010
        %v1012 = vpop.f32.mrb[0].mxu0
        %v1013 = vadd.f32 %v427, %v1012
        %v1014 = vpop.f32.mrb[0].mxu0
        %v1015 = vadd.f32 %v431, %v1014
        %1016 = vmatprep.mubr.bf16.mxu0 %v641
        %1017 = vmatmul.mubr.bf16.gmra.mrb[0].mxu0 %v640
        %v1018 = vpop.f32.mrb[0].mxu0
        %v1019 = vadd.f32 %v427, %v1018
        %v1020 = vpop.f32.mrb[0].mxu0
        %v1021 = vadd.f32 %v431, %v1020
        %v1022 = vpop.f32.mrb[0].mxu0
        %v1023 = vadd.f32 %v427, %v1022
        %v1024 = vpop.f32.mrb[0].mxu0
        %v1025 = vadd.f32 %v431, %v1024
        %1026 = vmatprep.mubr.bf16.mxu0 %v643
        %1027 = vmatmul.mubr.bf16.gmra.mrb[0].mxu0 %v642
        %v1028 = vpop.f32.mrb[0].mxu0
        %v1029 = vadd.f32 %v427, %v1028
        %v1030 = vpop.f32.mrb[0].mxu0
        %v1031 = vadd.f32 %v431, %v1030
        %v1032 = vpop.f32.mrb[0].mxu0
        %v1033 = vadd.f32 %v427, %v1032
        %v1034 = vpop.f32.mrb[0].mxu0
        %v1035 = vadd.f32 %v431, %v1034
        %1036 = vmatprep.mubr.bf16.mxu0 %v645
        %1037 = vmatmul.mubr.bf16.gmra.mrb[0].mxu0 %v644
        %v1038 = vpop.f32.mrb[0].mxu0
        %v1039 = vadd.f32 %v427, %v1038
        %v1040 = vpop.f32.mrb[0].mxu0
        %v1041 = vadd.f32 %v431, %v1040
        %v1042 = vpop.f32.mrb[0].mxu0
        %v1043 = vadd.f32 %v427, %v1042
        %v1044 = vpop.f32.mrb[0].mxu0
        %v1045 = vadd.f32 %v431, %v1044
        %1046 = vmatprep.mubr.bf16.mxu0 %v647
        %1047 = vmatmul.mubr.bf16.gmra.mrb[0].mxu0 %v646
        %v1048 = vpop.f32.mrb[0].mxu0
        %v1049 = vadd.f32 %v427, %v1048
        %v1050 = vpop.f32.mrb[0].mxu0
        %v1051 = vadd.f32 %v431, %v1050
        %v1052 = vpop.f32.mrb[0].mxu0
        %v1053 = vadd.f32 %v427, %v1052
        %v1054 = vpop.f32.mrb[0].mxu0
        %v1055 = vadd.f32 %v431, %v1054
        %1056 = vmatprep.mubr.bf16.mxu0 %v649
        %1057 = vmatmul.mubr.bf16.gmra.mrb[0].mxu0 %v648
        %v1058 = vpop.f32.mrb[0].mxu0
        %v1059 = vadd.f32 %v427, %v1058
        %v1060 = vpop.f32.mrb[0].mxu0
        %v1061 = vadd.f32 %v431, %v1060
        %v1062 = vpop.f32.mrb[0].mxu0
        %v1063 = vadd.f32 %v427, %v1062
        %v1064 = vpop.f32.mrb[0].mxu0
        %v1065 = vadd.f32 %v431, %v1064
        %1066 = vmatprep.mubr.bf16.mxu0 %v651
        %1067 = vmatmul.mubr.bf16.gmra.mrb[0].mxu0 %v650
        %v1068 = vpop.f32.mrb[0].mxu0
        %v1069 = vadd.f32 %v427, %v1068
        %v1070 = vpop.f32.mrb[0].mxu0
        %v1071 = vadd.f32 %v431, %v1070
        %v1072 = vpop.f32.mrb[0].mxu0
        %v1073 = vadd.f32 %v427, %v1072
        %v1074 = vpop.f32.mrb[0].mxu0
        %v1075 = vadd.f32 %v431, %v1074
        %1076 = vmatprep.mubr.bf16.mxu0 %v653
        %1077 = vmatmul.mubr.bf16.gmra.mrb[0].mxu0 %v652
        %v1078 = vpop.f32.mrb[0].mxu0
        %v1079 = vadd.f32 %v427, %v1078
        %v1080 = vpop.f32.mrb[0].mxu0
        %v1081 = vadd.f32 %v431, %v1080
        %v1082 = vpop.f32.mrb[0].mxu0
        %v1083 = vadd.f32 %v427, %v1082
        %v1084 = vpop.f32.mrb[0].mxu0
        %v1085 = vadd.f32 %v431, %v1084
        %1086 = vmatprep.mubr.bf16.mxu0 %v655
        %1087 = vmatmul.mubr.bf16.gmra.mrb[0].mxu0 %v654
        %v1088 = vpop.f32.mrb[0].mxu0
        %v1089 = vadd.f32 %v427, %v1088
        %v1090 = vpop.f32.mrb[0].mxu0
        %v1091 = vadd.f32 %v431, %v1090
        %v1092 = vpop.f32.mrb[0].mxu0
        %v1093 = vadd.f32 %v427, %v1092
        %v1094 = vpop.f32.mrb[0].mxu0
        %v1095 = vadd.f32 %v431, %v1094
        %1096 = vmatprep.mubr.bf16.mxu0 %v657
        %1097 = vmatmul.mubr.bf16.gmra.mrb[0].mxu0 %v656
        %v1098 = vpop.f32.mrb[0].mxu0
        %v1099 = vadd.f32 %v427, %v1098
        %v1100 = vpop.f32.mrb[0].mxu0
        %v1101 = vadd.f32 %v431, %v1100
        %v1102 = vpop.f32.mrb[0].mxu0
        %v1103 = vadd.f32 %v427, %v1102
        %v1104 = vpop.f32.mrb[0].mxu0
        %v1105 = vadd.f32 %v431, %v1104
        %1106 = vmatprep.mubr.bf16.mxu0 %v659
        %1107 = vmatmul.mubr.bf16.gmra.mrb[0].mxu0 %v658
        %v1108 = vpop.f32.mrb[0].mxu0
        %v1109 = vadd.f32 %v427, %v1108
        %v1110 = vpop.f32.mrb[0].mxu0
        %v1111 = vadd.f32 %v431, %v1110
        %v1112 = vpop.f32.mrb[0].mxu0
        %v1113 = vadd.f32 %v427, %v1112
        %v1114 = vpop.f32.mrb[0].mxu0
        %v1115 = vadd.f32 %v431, %v1114
        %1116 = vmatprep.mubr.bf16.mxu0 %v661
        %1117 = vmatmul.mubr.bf16.gmra.mrb[0].mxu0 %v660
        %v1118 = vpop.f32.mrb[0].mxu0
        %v1119 = vadd.f32 %v427, %v1118
        %v1120 = vpop.f32.mrb[0].mxu0
        %v1121 = vadd.f32 %v431, %v1120
        %v1122 = vpop.f32.mrb[0].mxu0
        %v1123 = vadd.f32 %v427, %v1122
        %v1124 = vpop.f32.mrb[0].mxu0
        %v1125 = vadd.f32 %v431, %v1124
        %1126 = vmatprep.mubr.bf16.mxu0 %v663
        %1127 = vmatmul.mubr.bf16.gmra.mrb[0].mxu0 %v662
        %v1128 = vpop.f32.mrb[0].mxu0
        %v1129 = vadd.f32 %v427, %v1128
        %v1130 = vpop.f32.mrb[0].mxu0
        %v1131 = vadd.f32 %v431, %v1130
        %v1132 = vpop.f32.mrb[0].mxu0
        %v1133 = vadd.f32 %v427, %v1132
        %v1134 = vpop.f32.mrb[0].mxu0
        %v1135 = vadd.f32 %v431, %v1134
        %1136 = vmatprep.mubr.bf16.mxu0 %v665
        %1137 = vmatmul.mubr.bf16.gmra.mrb[0].mxu0 %v664
        %v1138 = vpop.f32.mrb[0].mxu0
        %v1139 = vadd.f32 %v427, %v1138
        %v1140 = vpop.f32.mrb[0].mxu0
        %v1141 = vadd.f32 %v431, %v1140
        %v1142 = vpop.f32.mrb[0].mxu0
        %v1143 = vadd.f32 %v427, %v1142
        %v1144 = vpop.f32.mrb[0].mxu0
        %v1145 = vadd.f32 %v431, %v1144
        %1146 = vmatprep.mubr.bf16.mxu0 %v667
        %1147 = vmatmul.mubr.bf16.gmra.mrb[0].mxu0 %v666
        %v1148 = vpop.f32.mrb[0].mxu0
        %v1149 = vadd.f32 %v427, %v1148
        %v1150 = vpop.f32.mrb[0].mxu0
        %v1151 = vadd.f32 %v431, %v1150
        %v1152 = vpop.f32.mrb[0].mxu0
        %v1153 = vadd.f32 %v427, %v1152
        %v1154 = vpop.f32.mrb[0].mxu0
        %v1155 = vadd.f32 %v431, %v1154
        %1156 = vmatprep.mubr.bf16.mxu0 %v669
        %1157 = vmatmul.mubr.bf16.gmra.mrb[0].mxu0 %v668
        %v1158 = vpop.f32.mrb[0].mxu0
        %v1159 = vadd.f32 %v427, %v1158
        %v1160 = vpop.f32.mrb[0].mxu0
        %v1161 = vadd.f32 %v431, %v1160
        %v1162 = vpop.f32.mrb[0].mxu0
        %v1163 = vadd.f32 %v427, %v1162
        %v1164 = vpop.f32.mrb[0].mxu0
        %v1165 = vadd.f32 %v431, %v1164
        %1166 = vmatprep.mubr.bf16.mxu0 %v671
        %1167 = vmatmul.mubr.bf16.gmra.mrb[0].mxu0 %v670
        %v1168 = vpop.f32.mrb[0].mxu0
        %v1169 = vadd.f32 %v427, %v1168
        %v1170 = vpop.f32.mrb[0].mxu0
        %v1171 = vadd.f32 %v431, %v1170
        %v1172 = vpop.f32.mrb[0].mxu0
        %v1173 = vadd.f32 %v427, %v1172
        %v1174 = vpop.f32.mrb[0].mxu0
        %v1175 = vadd.f32 %v431, %v1174
        %1176 = vmatprep.mubr.bf16.mxu0 %v673
        %1177 = vmatmul.mubr.bf16.gmra.mrb[0].mxu0 %v672
        %v1178 = vpop.f32.mrb[0].mxu0
        %v1179 = vadd.f32 %v427, %v1178
        %v1180 = vpop.f32.mrb[0].mxu0
        %v1181 = vadd.f32 %v431, %v1180
        %v1182 = vpop.f32.mrb[0].mxu0
        %v1183 = vadd.f32 %v427, %v1182
        %v1184 = vpop.f32.mrb[0].mxu0
        %v1185 = vadd.f32 %v431, %v1184
        %1186 = vmatprep.mubr.bf16.mxu0 %v675
        %1187 = vmatmul.mubr.bf16.gmra.mrb[0].mxu0 %v674
        %v1188 = vpop.f32.mrb[0].mxu0
        %v1189 = vadd.f32 %v427, %v1188
        %v1190 = vpop.f32.mrb[0].mxu0
        %v1191 = vadd.f32 %v431, %v1190
        %v1192 = vpop.f32.mrb[0].mxu0
        %v1193 = vadd.f32 %v427, %v1192
        %v1194 = vpop.f32.mrb[0].mxu0
        %v1195 = vadd.f32 %v431, %v1194
        %1196 = vmatprep.mubr.bf16.mxu0 %v677
        %1197 = vmatmul.mubr.bf16.gmra.mrb[0].mxu0 %v676
        %v1198 = vpop.f32.mrb[0].mxu0
        %v1199 = vadd.f32 %v427, %v1198
        %v1200 = vpop.f32.mrb[0].mxu0
        %v1201 = vadd.f32 %v431, %v1200
        %v1202 = vpop.f32.mrb[0].mxu0
        %v1203 = vadd.f32 %v427, %v1202
        %v1204 = vpop.f32.mrb[0].mxu0
        %v1205 = vadd.f32 %v431, %v1204
        %1206 = vmatprep.mubr.bf16.mxu0 %v679
        %1207 = vmatmul.mubr.bf16.gmra.mrb[0].mxu0 %v678
        %v1208 = vpop.f32.mrb[0].mxu0
        %v1209 = vadd.f32 %v427, %v1208
        %v1210 = vpop.f32.mrb[0].mxu0
        %v1211 = vadd.f32 %v431, %v1210
        %v1212 = vpop.f32.mrb[0].mxu0
        %v1213 = vadd.f32 %v427, %v1212
        %v1214 = vpop.f32.mrb[0].mxu0
        %v1215 = vadd.f32 %v431, %v1214
        %1216 = vmatprep.mubr.bf16.mxu0 %v681
        %1217 = vmatmul.mubr.bf16.gmra.mrb[0].mxu0 %v680
        %v1218 = vpop.f32.mrb[0].mxu0
        %v1219 = vadd.f32 %v427, %v1218
        %v1220 = vpop.f32.mrb[0].mxu0
        %v1221 = vadd.f32 %v431, %v1220
        %v1222 = vpop.f32.mrb[0].mxu0
        %v1223 = vadd.f32 %v427, %v1222
        %v1224 = vpop.f32.mrb[0].mxu0
        %v1225 = vadd.f32 %v431, %v1224
        %1226 = vmatprep.mubr.bf16.mxu0 %v683
        %1227 = vmatmul.mubr.bf16.gmra.mrb[0].mxu0 %v682
        %v1228 = vpop.f32.mrb[0].mxu0
        %v1229 = vadd.f32 %v427, %v1228
        %v1230 = vpop.f32.mrb[0].mxu0
        %v1231 = vadd.f32 %v431, %v1230
        %v1232 = vpop.f32.mrb[0].mxu0
        %v1233 = vadd.f32 %v427, %v1232
        %v1234 = vpop.f32.mrb[0].mxu0
        %v1235 = vadd.f32 %v431, %v1234
        %1236 = vmatprep.mubr.bf16.mxu0 %v685
        %1237 = vmatmul.mubr.bf16.gmra.mrb[0].mxu0 %v684
        %v1238 = vpop.f32.mrb[0].mxu0
        %v1239 = vadd.f32 %v427, %v1238
        %v1240 = vpop.f32.mrb[0].mxu0
        %v1241 = vadd.f32 %v431, %v1240
        %v1242 = vpop.f32.mrb[0].mxu0
        %v1243 = vadd.f32 %v427, %v1242
        %v1244 = vpop.f32.mrb[0].mxu0
        %v1245 = vadd.f32 %v431, %v1244
        %1246 = vmatprep.mubr.bf16.mxu0 %v687
        %1247 = vmatmul.mubr.bf16.gmra.mrb[0].mxu0 %v686
        %v1248 = vpop.f32.mrb[0].mxu0
        %v1249 = vadd.f32 %v427, %v1248
        %v1250 = vpop.f32.mrb[0].mxu0
        %v1251 = vadd.f32 %v431, %v1250
        %v1252 = vpop.f32.mrb[0].mxu0
        %v1253 = vadd.f32 %v427, %v1252
        %v1254 = vpop.f32.mrb[0].mxu0
        %v1255 = vadd.f32 %v431, %v1254
        %1256 = vmatprep.mubr.bf16.mxu0 %v689
        %1257 = vmatmul.mubr.bf16.gmra.mrb[0].mxu0 %v688
        %v1258 = vpop.f32.mrb[0].mxu0
        %v1259 = vadd.f32 %v427, %v1258
        %v1260 = vpop.f32.mrb[0].mxu0
        %v1261 = vadd.f32 %v431, %v1260
        %v1262 = vpop.f32.mrb[0].mxu0
        %v1263 = vadd.f32 %v427, %v1262
        %v1264 = vpop.f32.mrb[0].mxu0
        %v1265 = vadd.f32 %v431, %v1264
        %1266 = vdwg.mxu0
        %v1267 = vld [vmem:[#allocation7] sm:$0xff]
        %v1268 = vld [vmem:[#allocation7 + $0x8] sm:$0xff]
        %v1269 = vld [vmem:[#allocation7 + $0x10] sm:$0xff]
        %v1270 = vld [vmem:[#allocation7 + $0x18] sm:$0xff]
        %v1271 = vld [vmem:[#allocation7 + $0x20] sm:$0xff]
        %v1272 = vld [vmem:[#allocation7 + $0x28] sm:$0xff]
        %v1273 = vld [vmem:[#allocation7 + $0x30] sm:$0xff]
        %v1274 = vld [vmem:[#allocation7 + $0x38] sm:$0xff]
        %v1275 = vld [vmem:[#allocation7 + $0x40] sm:$0xff]
        %v1276 = vld [vmem:[#allocation7 + $0x48] sm:$0xff]
        %v1277 = vld [vmem:[#allocation7 + $0x50] sm:$0xff]
        %v1278 = vld [vmem:[#allocation7 + $0x58] sm:$0xff]
        %v1279 = vld [vmem:[#allocation7 + $0x60] sm:$0xff]
        %v1280 = vld [vmem:[#allocation7 + $0x68] sm:$0xff]
        %v1281 = vld [vmem:[#allocation7 + $0x70] sm:$0xff]
        %v1282 = vld [vmem:[#allocation7 + $0x78] sm:$0xff]
        %v1283 = vld [vmem:[#allocation7 + $0x80] sm:$0xff]
        %v1284 = vld [vmem:[#allocation7 + $0x88] sm:$0xff]
        %v1285 = vld [vmem:[#allocation7 + $0x90] sm:$0xff]
        %v1286 = vld [vmem:[#allocation7 + $0x98] sm:$0xff]
        %v1287 = vld [vmem:[#allocation7 + $0xa0] sm:$0xff]
        %v1288 = vld [vmem:[#allocation7 + $0xa8] sm:$0xff]
        %v1289 = vld [vmem:[#allocation7 + $0xb0] sm:$0xff]
        %v1290 = vld [vmem:[#allocation7 + $0xb8] sm:$0xff]
        %v1291 = vld [vmem:[#allocation7 + $0xc0] sm:$0xff]
        %v1292 = vld [vmem:[#allocation7 + $0xc8] sm:$0xff]
        %v1293 = vld [vmem:[#allocation7 + $0xd0] sm:$0xff]
        %v1294 = vld [vmem:[#allocation7 + $0xd8] sm:$0xff]
        %v1295 = vld [vmem:[#allocation7 + $0xe0] sm:$0xff]
        %v1296 = vld [vmem:[#allocation7 + $0xe8] sm:$0xff]
        %v1297 = vld [vmem:[#allocation7 + $0xf0] sm:$0xff]
        %v1298 = vld [vmem:[#allocation7 + $0xf8] sm:$0xff]
        %v1299 = vld [vmem:[#allocation7 + $0x100] sm:$0xff]
        %v1300 = vld [vmem:[#allocation7 + $0x108] sm:$0xff]
        %v1301 = vld [vmem:[#allocation7 + $0x110] sm:$0xff]
        %v1302 = vld [vmem:[#allocation7 + $0x118] sm:$0xff]
        %v1303 = vld [vmem:[#allocation7 + $0x120] sm:$0xff]
        %v1304 = vld [vmem:[#allocation7 + $0x128] sm:$0xff]
        %v1305 = vld [vmem:[#allocation7 + $0x130] sm:$0xff]
        %v1306 = vld [vmem:[#allocation7 + $0x138] sm:$0xff]
        %v1307 = vld [vmem:[#allocation7 + $0x140] sm:$0xff]
        %v1308 = vld [vmem:[#allocation7 + $0x148] sm:$0xff]
        %v1309 = vld [vmem:[#allocation7 + $0x150] sm:$0xff]
        %v1310 = vld [vmem:[#allocation7 + $0x158] sm:$0xff]
        %v1311 = vld [vmem:[#allocation7 + $0x160] sm:$0xff]
        %v1312 = vld [vmem:[#allocation7 + $0x168] sm:$0xff]
        %v1313 = vld [vmem:[#allocation7 + $0x170] sm:$0xff]
        %v1314 = vld [vmem:[#allocation7 + $0x178] sm:$0xff]
        %v1315 = vld [vmem:[#allocation7 + $0x180] sm:$0xff]
        %v1316 = vld [vmem:[#allocation7 + $0x188] sm:$0xff]
        %v1317 = vld [vmem:[#allocation7 + $0x190] sm:$0xff]
        %v1318 = vld [vmem:[#allocation7 + $0x198] sm:$0xff]
        %v1319 = vld [vmem:[#allocation7 + $0x1a0] sm:$0xff]
        %v1320 = vld [vmem:[#allocation7 + $0x1a8] sm:$0xff]
        %v1321 = vld [vmem:[#allocation7 + $0x1b0] sm:$0xff]
        %v1322 = vld [vmem:[#allocation7 + $0x1b8] sm:$0xff]
        %v1323 = vld [vmem:[#allocation7 + $0x1c0] sm:$0xff]
        %v1324 = vld [vmem:[#allocation7 + $0x1c8] sm:$0xff]
        %v1325 = vld [vmem:[#allocation7 + $0x1d0] sm:$0xff]
        %v1326 = vld [vmem:[#allocation7 + $0x1d8] sm:$0xff]
        %v1327 = vld [vmem:[#allocation7 + $0x1e0] sm:$0xff]
        %v1328 = vld [vmem:[#allocation7 + $0x1e8] sm:$0xff]
        %v1329 = vld [vmem:[#allocation7 + $0x1f0] sm:$0xff]
        %v1330 = vld [vmem:[#allocation7 + $0x1f8] sm:$0xff]
        %v1331 = vld [vmem:[#allocation8] sm:$0xff]
        %v1332 = vld [vmem:[#allocation8 + $0x8] sm:$0xff]
        %v1333 = vld [vmem:[#allocation8 + $0x10] sm:$0xff]
        %v1334 = vld [vmem:[#allocation8 + $0x18] sm:$0xff]
        %v1335 = vld [vmem:[#allocation8 + $0x20] sm:$0xff]
        %v1336 = vld [vmem:[#allocation8 + $0x28] sm:$0xff]
        %v1337 = vld [vmem:[#allocation8 + $0x30] sm:$0xff]
        %v1338 = vld [vmem:[#allocation8 + $0x38] sm:$0xff]
        %v1339 = vld [vmem:[#allocation8 + $0x40] sm:$0xff]
        %v1340 = vld [vmem:[#allocation8 + $0x48] sm:$0xff]
        %v1341 = vld [vmem:[#allocation8 + $0x50] sm:$0xff]
        %v1342 = vld [vmem:[#allocation8 + $0x58] sm:$0xff]
        %v1343 = vld [vmem:[#allocation8 + $0x60] sm:$0xff]
        %v1344 = vld [vmem:[#allocation8 + $0x68] sm:$0xff]
        %v1345 = vld [vmem:[#allocation8 + $0x70] sm:$0xff]
        %v1346 = vld [vmem:[#allocation8 + $0x78] sm:$0xff]
        %v1347 = vld [vmem:[#allocation8 + $0x80] sm:$0xff]
        %v1348 = vld [vmem:[#allocation8 + $0x88] sm:$0xff]
        %v1349 = vld [vmem:[#allocation8 + $0x90] sm:$0xff]
        %v1350 = vld [vmem:[#allocation8 + $0x98] sm:$0xff]
        %v1351 = vld [vmem:[#allocation8 + $0xa0] sm:$0xff]
        %v1352 = vld [vmem:[#allocation8 + $0xa8] sm:$0xff]
        %v1353 = vld [vmem:[#allocation8 + $0xb0] sm:$0xff]
        %v1354 = vld [vmem:[#allocation8 + $0xb8] sm:$0xff]
        %v1355 = vld [vmem:[#allocation8 + $0xc0] sm:$0xff]
        %v1356 = vld [vmem:[#allocation8 + $0xc8] sm:$0xff]
        %v1357 = vld [vmem:[#allocation8 + $0xd0] sm:$0xff]
        %v1358 = vld [vmem:[#allocation8 + $0xd8] sm:$0xff]
        %v1359 = vld [vmem:[#allocation8 + $0xe0] sm:$0xff]
        %v1360 = vld [vmem:[#allocation8 + $0xe8] sm:$0xff]
        %v1361 = vld [vmem:[#allocation8 + $0xf0] sm:$0xff]
        %v1362 = vld [vmem:[#allocation8 + $0xf8] sm:$0xff]
        %v1363 = vld [vmem:[#allocation8 + $0x100] sm:$0xff]
        %v1364 = vld [vmem:[#allocation8 + $0x108] sm:$0xff]
        %v1365 = vld [vmem:[#allocation8 + $0x110] sm:$0xff]
        %v1366 = vld [vmem:[#allocation8 + $0x118] sm:$0xff]
        %v1367 = vld [vmem:[#allocation8 + $0x120] sm:$0xff]
        %v1368 = vld [vmem:[#allocation8 + $0x128] sm:$0xff]
        %v1369 = vld [vmem:[#allocation8 + $0x130] sm:$0xff]
        %v1370 = vld [vmem:[#allocation8 + $0x138] sm:$0xff]
        %v1371 = vld [vmem:[#allocation8 + $0x140] sm:$0xff]
        %v1372 = vld [vmem:[#allocation8 + $0x148] sm:$0xff]
        %v1373 = vld [vmem:[#allocation8 + $0x150] sm:$0xff]
        %v1374 = vld [vmem:[#allocation8 + $0x158] sm:$0xff]
        %v1375 = vld [vmem:[#allocation8 + $0x160] sm:$0xff]
        %v1376 = vld [vmem:[#allocation8 + $0x168] sm:$0xff]
        %v1377 = vld [vmem:[#allocation8 + $0x170] sm:$0xff]
        %v1378 = vld [vmem:[#allocation8 + $0x178] sm:$0xff]
        %v1379 = vld [vmem:[#allocation8 + $0x180] sm:$0xff]
        %v1380 = vld [vmem:[#allocation8 + $0x188] sm:$0xff]
        %v1381 = vld [vmem:[#allocation8 + $0x190] sm:$0xff]
        %v1382 = vld [vmem:[#allocation8 + $0x198] sm:$0xff]
        %v1383 = vld [vmem:[#allocation8 + $0x1a0] sm:$0xff]
        %v1384 = vld [vmem:[#allocation8 + $0x1a8] sm:$0xff]
        %v1385 = vld [vmem:[#allocation8 + $0x1b0] sm:$0xff]
        %v1386 = vld [vmem:[#allocation8 + $0x1b8] sm:$0xff]
        %v1387 = vld [vmem:[#allocation8 + $0x1c0] sm:$0xff]
        %v1388 = vld [vmem:[#allocation8 + $0x1c8] sm:$0xff]
        %v1389 = vld [vmem:[#allocation8 + $0x1d0] sm:$0xff]
        %v1390 = vld [vmem:[#allocation8 + $0x1d8] sm:$0xff]
        %v1391 = vld [vmem:[#allocation8 + $0x1e0] sm:$0xff]
        %v1392 = vld [vmem:[#allocation8 + $0x1e8] sm:$0xff]
        %v1393 = vld [vmem:[#allocation8 + $0x1f0] sm:$0xff]
        %v1394 = vld [vmem:[#allocation8 + $0x1f8] sm:$0xff]
        %1395 = vrot.lane.b32.xlu0 %v949, 64
        %v1396 = vpop.permute.xlu0 %1395
        %1397 = vrot.lane.b32.xlu0 %v953, 64
        %v1398 = vpop.permute.xlu0 %1397
        %1399 = vrot.lane.b32.xlu0 %v959, 64
        %v1400 = vpop.permute.xlu0 %1399
        %1401 = vrot.lane.b32.xlu0 %v963, 64
        %v1402 = vpop.permute.xlu0 %1401
        %1403 = vrot.lane.b32.xlu0 %v969, 64
        %v1404 = vpop.permute.xlu0 %1403
        %1405 = vrot.lane.b32.xlu0 %v973, 64
        %v1406 = vpop.permute.xlu0 %1405
        %1407 = vrot.lane.b32.xlu0 %v979, 64
        %v1408 = vpop.permute.xlu0 %1407
        %1409 = vrot.lane.b32.xlu0 %v983, 64
        %v1410 = vpop.permute.xlu0 %1409
        %1411 = vrot.lane.b32.xlu0 %v989, 64
        %v1412 = vpop.permute.xlu0 %1411
        %1413 = vrot.lane.b32.xlu0 %v993, 64
        %v1414 = vpop.permute.xlu0 %1413
        %1415 = vrot.lane.b32.xlu0 %v999, 64
        %v1416 = vpop.permute.xlu0 %1415
        %1417 = vrot.lane.b32.xlu0 %v1003, 64
        %v1418 = vpop.permute.xlu0 %1417
        %1419 = vrot.lane.b32.xlu0 %v1009, 64
        %v1420 = vpop.permute.xlu0 %1419
        %1421 = vrot.lane.b32.xlu0 %v1013, 64
        %v1422 = vpop.permute.xlu0 %1421
        %1423 = vrot.lane.b32.xlu0 %v1019, 64
        %v1424 = vpop.permute.xlu0 %1423
        %1425 = vrot.lane.b32.xlu0 %v1023, 64
        %v1426 = vpop.permute.xlu0 %1425
        %1427 = vrot.lane.b32.xlu0 %v1029, 64
        %v1428 = vpop.permute.xlu0 %1427
        %1429 = vrot.lane.b32.xlu0 %v1033, 64
        %v1430 = vpop.permute.xlu0 %1429
        %1431 = vrot.lane.b32.xlu0 %v1039, 64
        %v1432 = vpop.permute.xlu0 %1431
        %1433 = vrot.lane.b32.xlu0 %v1043, 64
        %v1434 = vpop.permute.xlu0 %1433
        %1435 = vrot.lane.b32.xlu0 %v1049, 64
        %v1436 = vpop.permute.xlu0 %1435
        %1437 = vrot.lane.b32.xlu0 %v1053, 64
        %v1438 = vpop.permute.xlu0 %1437
        %1439 = vrot.lane.b32.xlu0 %v1059, 64
        %v1440 = vpop.permute.xlu0 %1439
        %1441 = vrot.lane.b32.xlu0 %v1063, 64
        %v1442 = vpop.permute.xlu0 %1441
        %1443 = vrot.lane.b32.xlu0 %v1069, 64
        %v1444 = vpop.permute.xlu0 %1443
        %1445 = vrot.lane.b32.xlu0 %v1073, 64
        %v1446 = vpop.permute.xlu0 %1445
        %1447 = vrot.lane.b32.xlu0 %v1079, 64
        %v1448 = vpop.permute.xlu0 %1447
        %1449 = vrot.lane.b32.xlu0 %v1083, 64
        %v1450 = vpop.permute.xlu0 %1449
        %1451 = vrot.lane.b32.xlu0 %v1089, 64
        %v1452 = vpop.permute.xlu0 %1451
        %1453 = vrot.lane.b32.xlu0 %v1093, 64
        %v1454 = vpop.permute.xlu0 %1453
        %1455 = vrot.lane.b32.xlu0 %v1099, 64
        %v1456 = vpop.permute.xlu0 %1455
        %1457 = vrot.lane.b32.xlu0 %v1103, 64
        %v1458 = vpop.permute.xlu0 %1457
        %1459 = vrot.lane.b32.xlu0 %v1109, 64
        %v1460 = vpop.permute.xlu0 %1459
        %1461 = vrot.lane.b32.xlu0 %v1113, 64
        %v1462 = vpop.permute.xlu0 %1461
        %1463 = vrot.lane.b32.xlu0 %v1119, 64
        %v1464 = vpop.permute.xlu0 %1463
        %1465 = vrot.lane.b32.xlu0 %v1123, 64
        %v1466 = vpop.permute.xlu0 %1465
        %1467 = vrot.lane.b32.xlu0 %v1129, 64
        %v1468 = vpop.permute.xlu0 %1467
        %1469 = vrot.lane.b32.xlu0 %v1133, 64
        %v1470 = vpop.permute.xlu0 %1469
        %1471 = vrot.lane.b32.xlu0 %v1139, 64
        %v1472 = vpop.permute.xlu0 %1471
        %1473 = vrot.lane.b32.xlu0 %v1143, 64
        %v1474 = vpop.permute.xlu0 %1473
        %1475 = vrot.lane.b32.xlu0 %v1149, 64
        %v1476 = vpop.permute.xlu0 %1475
        %1477 = vrot.lane.b32.xlu0 %v1153, 64
        %v1478 = vpop.permute.xlu0 %1477
        %1479 = vrot.lane.b32.xlu0 %v1159, 64
        %v1480 = vpop.permute.xlu0 %1479
        %1481 = vrot.lane.b32.xlu0 %v1163, 64
        %v1482 = vpop.permute.xlu0 %1481
        %1483 = vrot.lane.b32.xlu0 %v1169, 64
        %v1484 = vpop.permute.xlu0 %1483
        %1485 = vrot.lane.b32.xlu0 %v1173, 64
        %v1486 = vpop.permute.xlu0 %1485
        %1487 = vrot.lane.b32.xlu0 %v1179, 64
        %v1488 = vpop.permute.xlu0 %1487
        %1489 = vrot.lane.b32.xlu0 %v1183, 64
        %v1490 = vpop.permute.xlu0 %1489
        %1491 = vrot.lane.b32.xlu0 %v1189, 64
        %v1492 = vpop.permute.xlu0 %1491
        %1493 = vrot.lane.b32.xlu0 %v1193, 64
        %v1494 = vpop.permute.xlu0 %1493
        %1495 = vrot.lane.b32.xlu0 %v1199, 64
        %v1496 = vpop.permute.xlu0 %1495
        %1497 = vrot.lane.b32.xlu0 %v1203, 64
        %v1498 = vpop.permute.xlu0 %1497
        %1499 = vrot.lane.b32.xlu0 %v1209, 64
        %v1500 = vpop.permute.xlu0 %1499
        %1501 = vrot.lane.b32.xlu0 %v1213, 64
        %v1502 = vpop.permute.xlu0 %1501
        %1503 = vrot.lane.b32.xlu0 %v1219, 64
        %v1504 = vpop.permute.xlu0 %1503
        %1505 = vrot.lane.b32.xlu0 %v1223, 64
        %v1506 = vpop.permute.xlu0 %1505
        %1507 = vrot.lane.b32.xlu0 %v1229, 64
        %v1508 = vpop.permute.xlu0 %1507
        %1509 = vrot.lane.b32.xlu0 %v1233, 64
        %v1510 = vpop.permute.xlu0 %1509
        %1511 = vrot.lane.b32.xlu0 %v1239, 64
        %v1512 = vpop.permute.xlu0 %1511
        %1513 = vrot.lane.b32.xlu0 %v1243, 64
        %v1514 = vpop.permute.xlu0 %1513
        %1515 = vrot.lane.b32.xlu0 %v1249, 64
        %v1516 = vpop.permute.xlu0 %1515
        %1517 = vrot.lane.b32.xlu0 %v1253, 64
        %v1518 = vpop.permute.xlu0 %1517
        %1519 = vrot.lane.b32.xlu0 %v1259, 64
        %v1520 = vpop.permute.xlu0 %1519
        %1521 = vrot.lane.b32.xlu0 %v1263, 64
        %v1522 = vpop.permute.xlu0 %1521
        %v1523 = vmul.f32 %v949, %v1267
        %v1524 = vmul.f32 %v953, %v1268
        %v1525 = vmul.f32 %v959, %v1269
        %v1526 = vmul.f32 %v963, %v1270
        %v1527 = vmul.f32 %v969, %v1271
        %v1528 = vmul.f32 %v973, %v1272
        %v1529 = vmul.f32 %v979, %v1273
        %v1530 = vmul.f32 %v983, %v1274
        %v1531 = vmul.f32 %v989, %v1275
        %v1532 = vmul.f32 %v993, %v1276
        %v1533 = vmul.f32 %v999, %v1277
        %v1534 = vmul.f32 %v1003, %v1278
        %v1535 = vmul.f32 %v1009, %v1279
        %v1536 = vmul.f32 %v1013, %v1280
        %v1537 = vmul.f32 %v1019, %v1281
        %v1538 = vmul.f32 %v1023, %v1282
        %v1539 = vmul.f32 %v1029, %v1283
        %v1540 = vmul.f32 %v1033, %v1284
        %v1541 = vmul.f32 %v1039, %v1285
        %v1542 = vmul.f32 %v1043, %v1286
        %v1543 = vmul.f32 %v1049, %v1287
        %v1544 = vmul.f32 %v1053, %v1288
        %v1545 = vmul.f32 %v1059, %v1289
        %v1546 = vmul.f32 %v1063, %v1290
        %v1547 = vmul.f32 %v1069, %v1291
        %v1548 = vmul.f32 %v1073, %v1292
        %v1549 = vmul.f32 %v1079, %v1293
        %v1550 = vmul.f32 %v1083, %v1294
        %v1551 = vmul.f32 %v1089, %v1295
        %v1552 = vmul.f32 %v1093, %v1296
        %v1553 = vmul.f32 %v1099, %v1297
        %v1554 = vmul.f32 %v1103, %v1298
        %v1555 = vmul.f32 %v1109, %v1299
        %v1556 = vmul.f32 %v1113, %v1300
        %v1557 = vmul.f32 %v1119, %v1301
        %v1558 = vmul.f32 %v1123, %v1302
        %v1559 = vmul.f32 %v1129, %v1303
        %v1560 = vmul.f32 %v1133, %v1304
        %v1561 = vmul.f32 %v1139, %v1305
        %v1562 = vmul.f32 %v1143, %v1306
        %v1563 = vmul.f32 %v1149, %v1307
        %v1564 = vmul.f32 %v1153, %v1308
        %v1565 = vmul.f32 %v1159, %v1309
        %v1566 = vmul.f32 %v1163, %v1310
        %v1567 = vmul.f32 %v1169, %v1311
        %v1568 = vmul.f32 %v1173, %v1312
        %v1569 = vmul.f32 %v1179, %v1313
        %v1570 = vmul.f32 %v1183, %v1314
        %v1571 = vmul.f32 %v1189, %v1315
        %v1572 = vmul.f32 %v1193, %v1316
        %v1573 = vmul.f32 %v1199, %v1317
        %v1574 = vmul.f32 %v1203, %v1318
        %v1575 = vmul.f32 %v1209, %v1319
        %v1576 = vmul.f32 %v1213, %v1320
        %v1577 = vmul.f32 %v1219, %v1321
        %v1578 = vmul.f32 %v1223, %v1322
        %v1579 = vmul.f32 %v1229, %v1323
        %v1580 = vmul.f32 %v1233, %v1324
        %v1581 = vmul.f32 %v1239, %v1325
        %v1582 = vmul.f32 %v1243, %v1326
        %v1583 = vmul.f32 %v1249, %v1327
        %v1584 = vmul.f32 %v1253, %v1328
        %v1585 = vmul.f32 %v1259, %v1329
        %v1586 = vmul.f32 %v1263, %v1330
        %v1587 = vmul.f32 %v1396, %v1331
        %v1588 = vmul.f32 %v1398, %v1332
        %v1589 = vmul.f32 %v1400, %v1333
        %v1590 = vmul.f32 %v1402, %v1334
        %v1591 = vmul.f32 %v1404, %v1335
        %v1592 = vmul.f32 %v1406, %v1336
        %v1593 = vmul.f32 %v1408, %v1337
        %v1594 = vmul.f32 %v1410, %v1338
        %v1595 = vmul.f32 %v1412, %v1339
        %v1596 = vmul.f32 %v1414, %v1340
        %v1597 = vmul.f32 %v1416, %v1341
        %v1598 = vmul.f32 %v1418, %v1342
        %v1599 = vmul.f32 %v1420, %v1343
        %v1600 = vmul.f32 %v1422, %v1344
        %v1601 = vmul.f32 %v1424, %v1345
        %v1602 = vmul.f32 %v1426, %v1346
        %v1603 = vmul.f32 %v1428, %v1347
        %v1604 = vmul.f32 %v1430, %v1348
        %v1605 = vmul.f32 %v1432, %v1349
        %v1606 = vmul.f32 %v1434, %v1350
        %v1607 = vmul.f32 %v1436, %v1351
        %v1608 = vmul.f32 %v1438, %v1352
        %v1609 = vmul.f32 %v1440, %v1353
        %v1610 = vmul.f32 %v1442, %v1354
        %v1611 = vmul.f32 %v1444, %v1355
        %v1612 = vmul.f32 %v1446, %v1356
        %v1613 = vmul.f32 %v1448, %v1357
        %v1614 = vmul.f32 %v1450, %v1358
        %v1615 = vmul.f32 %v1452, %v1359
        %v1616 = vmul.f32 %v1454, %v1360
        %v1617 = vmul.f32 %v1456, %v1361
        %v1618 = vmul.f32 %v1458, %v1362
        %v1619 = vmul.f32 %v1460, %v1363
        %v1620 = vmul.f32 %v1462, %v1364
        %v1621 = vmul.f32 %v1464, %v1365
        %v1622 = vmul.f32 %v1466, %v1366
        %v1623 = vmul.f32 %v1468, %v1367
        %v1624 = vmul.f32 %v1470, %v1368
        %v1625 = vmul.f32 %v1472, %v1369
        %v1626 = vmul.f32 %v1474, %v1370
        %v1627 = vmul.f32 %v1476, %v1371
        %v1628 = vmul.f32 %v1478, %v1372
        %v1629 = vmul.f32 %v1480, %v1373
        %v1630 = vmul.f32 %v1482, %v1374
        %v1631 = vmul.f32 %v1484, %v1375
        %v1632 = vmul.f32 %v1486, %v1376
        %v1633 = vmul.f32 %v1488, %v1377
        %v1634 = vmul.f32 %v1490, %v1378
        %v1635 = vmul.f32 %v1492, %v1379
        %v1636 = vmul.f32 %v1494, %v1380
        %v1637 = vmul.f32 %v1496, %v1381
        %v1638 = vmul.f32 %v1498, %v1382
        %v1639 = vmul.f32 %v1500, %v1383
        %v1640 = vmul.f32 %v1502, %v1384
        %v1641 = vmul.f32 %v1504, %v1385
        %v1642 = vmul.f32 %v1506, %v1386
        %v1643 = vmul.f32 %v1508, %v1387
        %v1644 = vmul.f32 %v1510, %v1388
        %v1645 = vmul.f32 %v1512, %v1389
        %v1646 = vmul.f32 %v1514, %v1390
        %v1647 = vmul.f32 %v1516, %v1391
        %v1648 = vmul.f32 %v1518, %v1392
        %v1649 = vmul.f32 %v1520, %v1393
        %v1650 = vmul.f32 %v1522, %v1394
        %v1651 = vadd.f32 %v1523, %v1587
        %v1652 = vadd.f32 %v1524, %v1588
        %v1653 = vadd.f32 %v1525, %v1589
        %v1654 = vadd.f32 %v1526, %v1590
        %v1655 = vadd.f32 %v1527, %v1591
        %v1656 = vadd.f32 %v1528, %v1592
        %v1657 = vadd.f32 %v1529, %v1593
        %v1658 = vadd.f32 %v1530, %v1594
        %v1659 = vadd.f32 %v1531, %v1595
        %v1660 = vadd.f32 %v1532, %v1596
        %v1661 = vadd.f32 %v1533, %v1597
        %v1662 = vadd.f32 %v1534, %v1598
        %v1663 = vadd.f32 %v1535, %v1599
        %v1664 = vadd.f32 %v1536, %v1600
        %v1665 = vadd.f32 %v1537, %v1601
        %v1666 = vadd.f32 %v1538, %v1602
        %v1667 = vadd.f32 %v1539, %v1603
        %v1668 = vadd.f32 %v1540, %v1604
        %v1669 = vadd.f32 %v1541, %v1605
        %v1670 = vadd.f32 %v1542, %v1606
        %v1671 = vadd.f32 %v1543, %v1607
        %v1672 = vadd.f32 %v1544, %v1608
        %v1673 = vadd.f32 %v1545, %v1609
        %v1674 = vadd.f32 %v1546, %v1610
        %v1675 = vadd.f32 %v1547, %v1611
        %v1676 = vadd.f32 %v1548, %v1612
        %v1677 = vadd.f32 %v1549, %v1613
        %v1678 = vadd.f32 %v1550, %v1614
        %v1679 = vadd.f32 %v1551, %v1615
        %v1680 = vadd.f32 %v1552, %v1616
        %v1681 = vadd.f32 %v1553, %v1617
        %v1682 = vadd.f32 %v1554, %v1618
        %v1683 = vadd.f32 %v1555, %v1619
        %v1684 = vadd.f32 %v1556, %v1620
        %v1685 = vadd.f32 %v1557, %v1621
        %v1686 = vadd.f32 %v1558, %v1622
        %v1687 = vadd.f32 %v1559, %v1623
        %v1688 = vadd.f32 %v1560, %v1624
        %v1689 = vadd.f32 %v1561, %v1625
        %v1690 = vadd.f32 %v1562, %v1626
        %v1691 = vadd.f32 %v1563, %v1627
        %v1692 = vadd.f32 %v1564, %v1628
        %v1693 = vadd.f32 %v1565, %v1629
        %v1694 = vadd.f32 %v1566, %v1630
        %v1695 = vadd.f32 %v1567, %v1631
        %v1696 = vadd.f32 %v1568, %v1632
        %v1697 = vadd.f32 %v1569, %v1633
        %v1698 = vadd.f32 %v1570, %v1634
        %v1699 = vadd.f32 %v1571, %v1635
        %v1700 = vadd.f32 %v1572, %v1636
        %v1701 = vadd.f32 %v1573, %v1637
        %v1702 = vadd.f32 %v1574, %v1638
        %v1703 = vadd.f32 %v1575, %v1639
        %v1704 = vadd.f32 %v1576, %v1640
        %v1705 = vadd.f32 %v1577, %v1641
        %v1706 = vadd.f32 %v1578, %v1642
        %v1707 = vadd.f32 %v1579, %v1643
        %v1708 = vadd.f32 %v1580, %v1644
        %v1709 = vadd.f32 %v1581, %v1645
        %v1710 = vadd.f32 %v1582, %v1646
        %v1711 = vadd.f32 %v1583, %v1647
        %v1712 = vadd.f32 %v1584, %v1648
        %v1713 = vadd.f32 %v1585, %v1649
        %v1714 = vadd.f32 %v1586, %v1650
        %v1715 = vpack.c.bf16 %v1652, %v1651
        %v1716 = vpack.c.bf16 %v1654, %v1653
        %v1717 = vpack.c.bf16 %v1656, %v1655
        %v1718 = vpack.c.bf16 %v1658, %v1657
        %v1719 = vpack.c.bf16 %v1660, %v1659
        %v1720 = vpack.c.bf16 %v1662, %v1661
        %v1721 = vpack.c.bf16 %v1664, %v1663
        %v1722 = vpack.c.bf16 %v1666, %v1665
        %v1723 = vpack.c.bf16 %v1668, %v1667
        %v1724 = vpack.c.bf16 %v1670, %v1669
        %v1725 = vpack.c.bf16 %v1672, %v1671
        %v1726 = vpack.c.bf16 %v1674, %v1673
        %v1727 = vpack.c.bf16 %v1676, %v1675
        %v1728 = vpack.c.bf16 %v1678, %v1677
        %v1729 = vpack.c.bf16 %v1680, %v1679
        %v1730 = vpack.c.bf16 %v1682, %v1681
        %v1731 = vpack.c.bf16 %v1684, %v1683
        %v1732 = vpack.c.bf16 %v1686, %v1685
        %v1733 = vpack.c.bf16 %v1688, %v1687
        %v1734 = vpack.c.bf16 %v1690, %v1689
        %v1735 = vpack.c.bf16 %v1692, %v1691
        %v1736 = vpack.c.bf16 %v1694, %v1693
        %v1737 = vpack.c.bf16 %v1696, %v1695
        %v1738 = vpack.c.bf16 %v1698, %v1697
        %v1739 = vpack.c.bf16 %v1700, %v1699
        %v1740 = vpack.c.bf16 %v1702, %v1701
        %v1741 = vpack.c.bf16 %v1704, %v1703
        %v1742 = vpack.c.bf16 %v1706, %v1705
        %v1743 = vpack.c.bf16 %v1708, %v1707
        %v1744 = vpack.c.bf16 %v1710, %v1709
        %v1745 = vpack.c.bf16 %v1712, %v1711
        %v1746 = vpack.c.bf16 %v1714, %v1713
        %v1779 = vunpack.c.l.b16 %v1715
        %v1780 = vunpack.c.h.b16 %v1715
        %v1781 = vunpack.c.l.b16 %v1716
        %v1782 = vunpack.c.h.b16 %v1716
        %v1783 = vunpack.c.l.b16 %v1717
        %v1784 = vunpack.c.h.b16 %v1717
        %v1785 = vunpack.c.l.b16 %v1718
        %v1786 = vunpack.c.h.b16 %v1718
        %v1787 = vunpack.c.l.b16 %v1719
        %v1788 = vunpack.c.h.b16 %v1719
        %v1789 = vunpack.c.l.b16 %v1720
        %v1790 = vunpack.c.h.b16 %v1720
        %v1791 = vunpack.c.l.b16 %v1721
        %v1792 = vunpack.c.h.b16 %v1721
        %v1793 = vunpack.c.l.b16 %v1722
        %v1794 = vunpack.c.h.b16 %v1722
        %v1795 = vunpack.c.l.b16 %v1723
        %v1796 = vunpack.c.h.b16 %v1723
        %v1797 = vunpack.c.l.b16 %v1724
        %v1798 = vunpack.c.h.b16 %v1724
        %v1799 = vunpack.c.l.b16 %v1725
        %v1800 = vunpack.c.h.b16 %v1725
        %v1801 = vunpack.c.l.b16 %v1726
        %v1802 = vunpack.c.h.b16 %v1726
        %v1803 = vunpack.c.l.b16 %v1727
        %v1804 = vunpack.c.h.b16 %v1727
        %v1805 = vunpack.c.l.b16 %v1728
        %v1806 = vunpack.c.h.b16 %v1728
        %v1807 = vunpack.c.l.b16 %v1729
        %v1808 = vunpack.c.h.b16 %v1729
        %v1809 = vunpack.c.l.b16 %v1730
        %v1810 = vunpack.c.h.b16 %v1730
        %v1811 = vunpack.c.l.b16 %v1731
        %v1812 = vunpack.c.h.b16 %v1731
        %v1813 = vunpack.c.l.b16 %v1732
        %v1814 = vunpack.c.h.b16 %v1732
        %v1815 = vunpack.c.l.b16 %v1733
        %v1816 = vunpack.c.h.b16 %v1733
        %v1817 = vunpack.c.l.b16 %v1734
        %v1818 = vunpack.c.h.b16 %v1734
        %v1819 = vunpack.c.l.b16 %v1735
        %v1820 = vunpack.c.h.b16 %v1735
        %v1821 = vunpack.c.l.b16 %v1736
        %v1822 = vunpack.c.h.b16 %v1736
        %v1823 = vunpack.c.l.b16 %v1737
        %v1824 = vunpack.c.h.b16 %v1737
        %v1825 = vunpack.c.l.b16 %v1738
        %v1826 = vunpack.c.h.b16 %v1738
        %v1827 = vunpack.c.l.b16 %v1739
        %v1828 = vunpack.c.h.b16 %v1739
        %v1829 = vunpack.c.l.b16 %v1740
        %v1830 = vunpack.c.h.b16 %v1740
        %v1831 = vunpack.c.l.b16 %v1741
        %v1832 = vunpack.c.h.b16 %v1741
        %v1833 = vunpack.c.l.b16 %v1742
        %v1834 = vunpack.c.h.b16 %v1742
        %v1835 = vunpack.c.l.b16 %v1743
        %v1836 = vunpack.c.h.b16 %v1743
        %v1837 = vunpack.c.l.b16 %v1744
        %v1838 = vunpack.c.h.b16 %v1744
        %v1839 = vunpack.c.l.b16 %v1745
        %v1840 = vunpack.c.h.b16 %v1745
        %v1841 = vunpack.c.l.b16 %v1746
        %v1842 = vunpack.c.h.b16 %v1746
        %v1843 = vpack.c.b16 %v1779, %v1779
        %v1844 = vpack.c.b16 %v1780, %v1780
        %v1845 = vpack.c.b16 %v1781, %v1781
        %v1846 = vpack.c.b16 %v1782, %v1782
        %v1847 = vpack.c.b16 %v1783, %v1783
        %v1848 = vpack.c.b16 %v1784, %v1784
        %v1849 = vpack.c.b16 %v1785, %v1785
        %v1850 = vpack.c.b16 %v1786, %v1786
        %v1851 = vpack.c.b16 %v1787, %v1787
        %v1852 = vpack.c.b16 %v1788, %v1788
        %v1853 = vpack.c.b16 %v1789, %v1789
        %v1854 = vpack.c.b16 %v1790, %v1790
        %v1855 = vpack.c.b16 %v1791, %v1791
        %v1856 = vpack.c.b16 %v1792, %v1792
        %v1857 = vpack.c.b16 %v1793, %v1793
        %v1858 = vpack.c.b16 %v1794, %v1794
        %v1859 = vpack.c.b16 %v1795, %v1795
        %v1860 = vpack.c.b16 %v1796, %v1796
        %v1861 = vpack.c.b16 %v1797, %v1797
        %v1862 = vpack.c.b16 %v1798, %v1798
        %v1863 = vpack.c.b16 %v1799, %v1799
        %v1864 = vpack.c.b16 %v1800, %v1800
        %v1865 = vpack.c.b16 %v1801, %v1801
        %v1866 = vpack.c.b16 %v1802, %v1802
        %v1867 = vpack.c.b16 %v1803, %v1803
        %v1868 = vpack.c.b16 %v1804, %v1804
        %v1869 = vpack.c.b16 %v1805, %v1805
        %v1870 = vpack.c.b16 %v1806, %v1806
        %v1871 = vpack.c.b16 %v1807, %v1807
        %v1872 = vpack.c.b16 %v1808, %v1808
        %v1873 = vpack.c.b16 %v1809, %v1809
        %v1874 = vpack.c.b16 %v1810, %v1810
        %v1875 = vpack.c.b16 %v1811, %v1811
        %v1876 = vpack.c.b16 %v1812, %v1812
        %v1877 = vpack.c.b16 %v1813, %v1813
        %v1878 = vpack.c.b16 %v1814, %v1814
        %v1879 = vpack.c.b16 %v1815, %v1815
        %v1880 = vpack.c.b16 %v1816, %v1816
        %v1881 = vpack.c.b16 %v1817, %v1817
        %v1882 = vpack.c.b16 %v1818, %v1818
        %v1883 = vpack.c.b16 %v1819, %v1819
        %v1884 = vpack.c.b16 %v1820, %v1820
        %v1885 = vpack.c.b16 %v1821, %v1821
        %v1886 = vpack.c.b16 %v1822, %v1822
        %v1887 = vpack.c.b16 %v1823, %v1823
        %v1888 = vpack.c.b16 %v1824, %v1824
        %v1889 = vpack.c.b16 %v1825, %v1825
        %v1890 = vpack.c.b16 %v1826, %v1826
        %v1891 = vpack.c.b16 %v1827, %v1827
        %v1892 = vpack.c.b16 %v1828, %v1828
        %v1893 = vpack.c.b16 %v1829, %v1829
        %v1894 = vpack.c.b16 %v1830, %v1830
        %v1895 = vpack.c.b16 %v1831, %v1831
        %v1896 = vpack.c.b16 %v1832, %v1832
        %v1897 = vpack.c.b16 %v1833, %v1833
        %v1898 = vpack.c.b16 %v1834, %v1834
        %v1899 = vpack.c.b16 %v1835, %v1835
        %v1900 = vpack.c.b16 %v1836, %v1836
        %v1901 = vpack.c.b16 %v1837, %v1837
        %v1902 = vpack.c.b16 %v1838, %v1838
        %v1903 = vpack.c.b16 %v1839, %v1839
        %v1904 = vpack.c.b16 %v1840, %v1840
        %v1905 = vpack.c.b16 %v1841, %v1841
        %v1906 = vpack.c.b16 %v1842, %v1842
        %1971 = vst [vmem:[%s321] sm:$0xf] %v1843
        %1972 = vst [vmem:[%s321 + $0x4] sm:$0xf] %v1844
        %1973 = vst [vmem:[%s321 + $0x8] sm:$0xf] %v1845
        %1974 = vst [vmem:[%s321 + $0xc] sm:$0xf] %v1846
        %1975 = vst [vmem:[%s321 + $0x10] sm:$0xf] %v1847
        %1976 = vst [vmem:[%s321 + $0x14] sm:$0xf] %v1848
        %1977 = vst [vmem:[%s321 + $0x18] sm:$0xf] %v1849
        %1978 = vst [vmem:[%s321 + $0x1c] sm:$0xf] %v1850
        %1979 = vst [vmem:[%s321 + $0x20] sm:$0xf] %v1851
        %1980 = vst [vmem:[%s321 + $0x24] sm:$0xf] %v1852
        %1981 = vst [vmem:[%s321 + $0x28] sm:$0xf] %v1853
        %1982 = vst [vmem:[%s321 + $0x2c] sm:$0xf] %v1854
        %1983 = vst [vmem:[%s321 + $0x30] sm:$0xf] %v1855
        %1984 = vst [vmem:[%s321 + $0x34] sm:$0xf] %v1856
        %1985 = vst [vmem:[%s321 + $0x38] sm:$0xf] %v1857
        %1986 = vst [vmem:[%s321 + $0x3c] sm:$0xf] %v1858
        %1987 = vst [vmem:[%s321 + $0x40] sm:$0xf] %v1859
        %1988 = vst [vmem:[%s321 + $0x44] sm:$0xf] %v1860
        %1989 = vst [vmem:[%s321 + $0x48] sm:$0xf] %v1861
        %1990 = vst [vmem:[%s321 + $0x4c] sm:$0xf] %v1862
        %1991 = vst [vmem:[%s321 + $0x50] sm:$0xf] %v1863
        %1992 = vst [vmem:[%s321 + $0x54] sm:$0xf] %v1864
        %1993 = vst [vmem:[%s321 + $0x58] sm:$0xf] %v1865
        %1994 = vst [vmem:[%s321 + $0x5c] sm:$0xf] %v1866
        %1995 = vst [vmem:[%s321 + $0x60] sm:$0xf] %v1867
        %1996 = vst [vmem:[%s321 + $0x64] sm:$0xf] %v1868
        %1997 = vst [vmem:[%s321 + $0x68] sm:$0xf] %v1869
        %1998 = vst [vmem:[%s321 + $0x6c] sm:$0xf] %v1870
        %1999 = vst [vmem:[%s321 + $0x70] sm:$0xf] %v1871
        %2000 = vst [vmem:[%s321 + $0x74] sm:$0xf] %v1872
        %2001 = vst [vmem:[%s321 + $0x78] sm:$0xf] %v1873
        %2002 = vst [vmem:[%s321 + $0x7c] sm:$0xf] %v1874
        %2003 = vst [vmem:[%s321 + $0x80] sm:$0xf] %v1875
        %2004 = vst [vmem:[%s321 + $0x84] sm:$0xf] %v1876
        %2005 = vst [vmem:[%s321 + $0x88] sm:$0xf] %v1877
        %2006 = vst [vmem:[%s321 + $0x8c] sm:$0xf] %v1878
        %2007 = vst [vmem:[%s321 + $0x90] sm:$0xf] %v1879
        %2008 = vst [vmem:[%s321 + $0x94] sm:$0xf] %v1880
        %2009 = vst [vmem:[%s321 + $0x98] sm:$0xf] %v1881
        %2010 = vst [vmem:[%s321 + $0x9c] sm:$0xf] %v1882
        %2011 = vst [vmem:[%s321 + $0xa0] sm:$0xf] %v1883
        %2012 = vst [vmem:[%s321 + $0xa4] sm:$0xf] %v1884
        %2013 = vst [vmem:[%s321 + $0xa8] sm:$0xf] %v1885
        %2014 = vst [vmem:[%s321 + $0xac] sm:$0xf] %v1886
        %2015 = vst [vmem:[%s321 + $0xb0] sm:$0xf] %v1887
        %2016 = vst [vmem:[%s321 + $0xb4] sm:$0xf] %v1888
        %2017 = vst [vmem:[%s321 + $0xb8] sm:$0xf] %v1889
        %2018 = vst [vmem:[%s321 + $0xbc] sm:$0xf] %v1890
        %2019 = vst [vmem:[%s321 + $0xc0] sm:$0xf] %v1891
        %2020 = vst [vmem:[%s321 + $0xc4] sm:$0xf] %v1892
        %2021 = vst [vmem:[%s321 + $0xc8] sm:$0xf] %v1893
        %2022 = vst [vmem:[%s321 + $0xcc] sm:$0xf] %v1894
        %2023 = vst [vmem:[%s321 + $0xd0] sm:$0xf] %v1895
        %2024 = vst [vmem:[%s321 + $0xd4] sm:$0xf] %v1896
        %2025 = vst [vmem:[%s321 + $0xd8] sm:$0xf] %v1897
        %2026 = vst [vmem:[%s321 + $0xdc] sm:$0xf] %v1898
        %2027 = vst [vmem:[%s321 + $0xe0] sm:$0xf] %v1899
        %2028 = vst [vmem:[%s321 + $0xe4] sm:$0xf] %v1900
        %2029 = vst [vmem:[%s321 + $0xe8] sm:$0xf] %v1901
        %2030 = vst [vmem:[%s321 + $0xec] sm:$0xf] %v1902
        %2031 = vst [vmem:[%s321 + $0xf0] sm:$0xf] %v1903
        %2032 = vst [vmem:[%s321 + $0xf4] sm:$0xf] %v1904
        %2033 = vst [vmem:[%s321 + $0xf8] sm:$0xf] %v1905
        %2034 = vst [vmem:[%s321 + $0xfc] sm:$0xf] %v1906
        %2035 = vrot.lane.b32.xlu0 %v951, 64
        %v2036 = vpop.permute.xlu0 %2035
        %2037 = vrot.lane.b32.xlu0 %v955, 64
        %v2038 = vpop.permute.xlu0 %2037
        %2039 = vrot.lane.b32.xlu0 %v961, 64
        %v2040 = vpop.permute.xlu0 %2039
        %2041 = vrot.lane.b32.xlu0 %v965, 64
        %v2042 = vpop.permute.xlu0 %2041
        %2043 = vrot.lane.b32.xlu0 %v971, 64
        %v2044 = vpop.permute.xlu0 %2043
        %2045 = vrot.lane.b32.xlu0 %v975, 64
        %v2046 = vpop.permute.xlu0 %2045
        %2047 = vrot.lane.b32.xlu0 %v981, 64
        %v2048 = vpop.permute.xlu0 %2047
        %2049 = vrot.lane.b32.xlu0 %v985, 64
        %v2050 = vpop.permute.xlu0 %2049
        %2051 = vrot.lane.b32.xlu0 %v991, 64
        %v2052 = vpop.permute.xlu0 %2051
        %2053 = vrot.lane.b32.xlu0 %v995, 64
        %v2054 = vpop.permute.xlu0 %2053
        %2055 = vrot.lane.b32.xlu0 %v1001, 64
        %v2056 = vpop.permute.xlu0 %2055
        %2057 = vrot.lane.b32.xlu0 %v1005, 64
        %v2058 = vpop.permute.xlu0 %2057
        %2059 = vrot.lane.b32.xlu0 %v1011, 64
        %v2060 = vpop.permute.xlu0 %2059
        %2061 = vrot.lane.b32.xlu0 %v1015, 64
        %v2062 = vpop.permute.xlu0 %2061
        %2063 = vrot.lane.b32.xlu0 %v1021, 64
        %v2064 = vpop.permute.xlu0 %2063
        %2065 = vrot.lane.b32.xlu0 %v1025, 64
        %v2066 = vpop.permute.xlu0 %2065
        %2067 = vrot.lane.b32.xlu0 %v1031, 64
        %v2068 = vpop.permute.xlu0 %2067
        %2069 = vrot.lane.b32.xlu0 %v1035, 64
        %v2070 = vpop.permute.xlu0 %2069
        %2071 = vrot.lane.b32.xlu0 %v1041, 64
        %v2072 = vpop.permute.xlu0 %2071
        %2073 = vrot.lane.b32.xlu0 %v1045, 64
        %v2074 = vpop.permute.xlu0 %2073
        %2075 = vrot.lane.b32.xlu0 %v1051, 64
        %v2076 = vpop.permute.xlu0 %2075
        %2077 = vrot.lane.b32.xlu0 %v1055, 64
        %v2078 = vpop.permute.xlu0 %2077
        %2079 = vrot.lane.b32.xlu0 %v1061, 64
        %v2080 = vpop.permute.xlu0 %2079
        %2081 = vrot.lane.b32.xlu0 %v1065, 64
        %v2082 = vpop.permute.xlu0 %2081
        %2083 = vrot.lane.b32.xlu0 %v1071, 64
        %v2084 = vpop.permute.xlu0 %2083
        %2085 = vrot.lane.b32.xlu0 %v1075, 64
        %v2086 = vpop.permute.xlu0 %2085
        %2087 = vrot.lane.b32.xlu0 %v1081, 64
        %v2088 = vpop.permute.xlu0 %2087
        %2089 = vrot.lane.b32.xlu0 %v1085, 64
        %v2090 = vpop.permute.xlu0 %2089
        %2091 = vrot.lane.b32.xlu0 %v1091, 64
        %v2092 = vpop.permute.xlu0 %2091
        %2093 = vrot.lane.b32.xlu0 %v1095, 64
        %v2094 = vpop.permute.xlu0 %2093
        %2095 = vrot.lane.b32.xlu0 %v1101, 64
        %v2096 = vpop.permute.xlu0 %2095
        %2097 = vrot.lane.b32.xlu0 %v1105, 64
        %v2098 = vpop.permute.xlu0 %2097
        %2099 = vrot.lane.b32.xlu0 %v1111, 64
        %v2100 = vpop.permute.xlu0 %2099
        %2101 = vrot.lane.b32.xlu0 %v1115, 64
        %v2102 = vpop.permute.xlu0 %2101
        %2103 = vrot.lane.b32.xlu0 %v1121, 64
        %v2104 = vpop.permute.xlu0 %2103
        %2105 = vrot.lane.b32.xlu0 %v1125, 64
        %v2106 = vpop.permute.xlu0 %2105
        %2107 = vrot.lane.b32.xlu0 %v1131, 64
        %v2108 = vpop.permute.xlu0 %2107
        %2109 = vrot.lane.b32.xlu0 %v1135, 64
        %v2110 = vpop.permute.xlu0 %2109
        %2111 = vrot.lane.b32.xlu0 %v1141, 64
        %v2112 = vpop.permute.xlu0 %2111
        %2113 = vrot.lane.b32.xlu0 %v1145, 64
        %v2114 = vpop.permute.xlu0 %2113
        %2115 = vrot.lane.b32.xlu0 %v1151, 64
        %v2116 = vpop.permute.xlu0 %2115
        %2117 = vrot.lane.b32.xlu0 %v1155, 64
        %v2118 = vpop.permute.xlu0 %2117
        %2119 = vrot.lane.b32.xlu0 %v1161, 64
        %v2120 = vpop.permute.xlu0 %2119
        %2121 = vrot.lane.b32.xlu0 %v1165, 64
        %v2122 = vpop.permute.xlu0 %2121
        %2123 = vrot.lane.b32.xlu0 %v1171, 64
        %v2124 = vpop.permute.xlu0 %2123
        %2125 = vrot.lane.b32.xlu0 %v1175, 64
        %v2126 = vpop.permute.xlu0 %2125
        %2127 = vrot.lane.b32.xlu0 %v1181, 64
        %v2128 = vpop.permute.xlu0 %2127
        %2129 = vrot.lane.b32.xlu0 %v1185, 64
        %v2130 = vpop.permute.xlu0 %2129
        %2131 = vrot.lane.b32.xlu0 %v1191, 64
        %v2132 = vpop.permute.xlu0 %2131
        %2133 = vrot.lane.b32.xlu0 %v1195, 64
        %v2134 = vpop.permute.xlu0 %2133
        %2135 = vrot.lane.b32.xlu0 %v1201, 64
        %v2136 = vpop.permute.xlu0 %2135
        %2137 = vrot.lane.b32.xlu0 %v1205, 64
        %v2138 = vpop.permute.xlu0 %2137
        %2139 = vrot.lane.b32.xlu0 %v1211, 64
        %v2140 = vpop.permute.xlu0 %2139
        %2141 = vrot.lane.b32.xlu0 %v1215, 64
        %v2142 = vpop.permute.xlu0 %2141
        %2143 = vrot.lane.b32.xlu0 %v1221, 64
        %v2144 = vpop.permute.xlu0 %2143
        %2145 = vrot.lane.b32.xlu0 %v1225, 64
        %v2146 = vpop.permute.xlu0 %2145
        %2147 = vrot.lane.b32.xlu0 %v1231, 64
        %v2148 = vpop.permute.xlu0 %2147
        %2149 = vrot.lane.b32.xlu0 %v1235, 64
        %v2150 = vpop.permute.xlu0 %2149
        %2151 = vrot.lane.b32.xlu0 %v1241, 64
        %v2152 = vpop.permute.xlu0 %2151
        %2153 = vrot.lane.b32.xlu0 %v1245, 64
        %v2154 = vpop.permute.xlu0 %2153
        %2155 = vrot.lane.b32.xlu0 %v1251, 64
        %v2156 = vpop.permute.xlu0 %2155
        %2157 = vrot.lane.b32.xlu0 %v1255, 64
        %v2158 = vpop.permute.xlu0 %2157
        %2159 = vrot.lane.b32.xlu0 %v1261, 64
        %v2160 = vpop.permute.xlu0 %2159
        %2161 = vrot.lane.b32.xlu0 %v1265, 64
        %v2162 = vpop.permute.xlu0 %2161
        %v2163 = vmul.f32 %v951, %v1267
        %v2164 = vmul.f32 %v955, %v1268
        %v2165 = vmul.f32 %v961, %v1269
        %v2166 = vmul.f32 %v965, %v1270
        %v2167 = vmul.f32 %v971, %v1271
        %v2168 = vmul.f32 %v975, %v1272
        %v2169 = vmul.f32 %v981, %v1273
        %v2170 = vmul.f32 %v985, %v1274
        %v2171 = vmul.f32 %v991, %v1275
        %v2172 = vmul.f32 %v995, %v1276
        %v2173 = vmul.f32 %v1001, %v1277
        %v2174 = vmul.f32 %v1005, %v1278
        %v2175 = vmul.f32 %v1011, %v1279
        %v2176 = vmul.f32 %v1015, %v1280
        %v2177 = vmul.f32 %v1021, %v1281
        %v2178 = vmul.f32 %v1025, %v1282
        %v2179 = vmul.f32 %v1031, %v1283
        %v2180 = vmul.f32 %v1035, %v1284
        %v2181 = vmul.f32 %v1041, %v1285
        %v2182 = vmul.f32 %v1045, %v1286
        %v2183 = vmul.f32 %v1051, %v1287
        %v2184 = vmul.f32 %v1055, %v1288
        %v2185 = vmul.f32 %v1061, %v1289
        %v2186 = vmul.f32 %v1065, %v1290
        %v2187 = vmul.f32 %v1071, %v1291
        %v2188 = vmul.f32 %v1075, %v1292
        %v2189 = vmul.f32 %v1081, %v1293
        %v2190 = vmul.f32 %v1085, %v1294
        %v2191 = vmul.f32 %v1091, %v1295
        %v2192 = vmul.f32 %v1095, %v1296
        %v2193 = vmul.f32 %v1101, %v1297
        %v2194 = vmul.f32 %v1105, %v1298
        %v2195 = vmul.f32 %v1111, %v1299
        %v2196 = vmul.f32 %v1115, %v1300
        %v2197 = vmul.f32 %v1121, %v1301
        %v2198 = vmul.f32 %v1125, %v1302
        %v2199 = vmul.f32 %v1131, %v1303
        %v2200 = vmul.f32 %v1135, %v1304
        %v2201 = vmul.f32 %v1141, %v1305
        %v2202 = vmul.f32 %v1145, %v1306
        %v2203 = vmul.f32 %v1151, %v1307
        %v2204 = vmul.f32 %v1155, %v1308
        %v2205 = vmul.f32 %v1161, %v1309
        %v2206 = vmul.f32 %v1165, %v1310
        %v2207 = vmul.f32 %v1171, %v1311
        %v2208 = vmul.f32 %v1175, %v1312
        %v2209 = vmul.f32 %v1181, %v1313
        %v2210 = vmul.f32 %v1185, %v1314
        %v2211 = vmul.f32 %v1191, %v1315
        %v2212 = vmul.f32 %v1195, %v1316
        %v2213 = vmul.f32 %v1201, %v1317
        %v2214 = vmul.f32 %v1205, %v1318
        %v2215 = vmul.f32 %v1211, %v1319
        %v2216 = vmul.f32 %v1215, %v1320
        %v2217 = vmul.f32 %v1221, %v1321
        %v2218 = vmul.f32 %v1225, %v1322
        %v2219 = vmul.f32 %v1231, %v1323
        %v2220 = vmul.f32 %v1235, %v1324
        %v2221 = vmul.f32 %v1241, %v1325
        %v2222 = vmul.f32 %v1245, %v1326
        %v2223 = vmul.f32 %v1251, %v1327
        %v2224 = vmul.f32 %v1255, %v1328
        %v2225 = vmul.f32 %v1261, %v1329
        %v2226 = vmul.f32 %v1265, %v1330
        %v2227 = vmul.f32 %v2036, %v1331
        %v2228 = vmul.f32 %v2038, %v1332
        %v2229 = vmul.f32 %v2040, %v1333
        %v2230 = vmul.f32 %v2042, %v1334
        %v2231 = vmul.f32 %v2044, %v1335
        %v2232 = vmul.f32 %v2046, %v1336
        %v2233 = vmul.f32 %v2048, %v1337
        %v2234 = vmul.f32 %v2050, %v1338
        %v2235 = vmul.f32 %v2052, %v1339
        %v2236 = vmul.f32 %v2054, %v1340
        %v2237 = vmul.f32 %v2056, %v1341
        %v2238 = vmul.f32 %v2058, %v1342
        %v2239 = vmul.f32 %v2060, %v1343
        %v2240 = vmul.f32 %v2062, %v1344
        %v2241 = vmul.f32 %v2064, %v1345
        %v2242 = vmul.f32 %v2066, %v1346
        %v2243 = vmul.f32 %v2068, %v1347
        %v2244 = vmul.f32 %v2070, %v1348
        %v2245 = vmul.f32 %v2072, %v1349
        %v2246 = vmul.f32 %v2074, %v1350
        %v2247 = vmul.f32 %v2076, %v1351
        %v2248 = vmul.f32 %v2078, %v1352
        %v2249 = vmul.f32 %v2080, %v1353
        %v2250 = vmul.f32 %v2082, %v1354
        %v2251 = vmul.f32 %v2084, %v1355
        %v2252 = vmul.f32 %v2086, %v1356
        %v2253 = vmul.f32 %v2088, %v1357
        %v2254 = vmul.f32 %v2090, %v1358
        %v2255 = vmul.f32 %v2092, %v1359
        %v2256 = vmul.f32 %v2094, %v1360
        %v2257 = vmul.f32 %v2096, %v1361
        %v2258 = vmul.f32 %v2098, %v1362
        %v2259 = vmul.f32 %v2100, %v1363
        %v2260 = vmul.f32 %v2102, %v1364
        %v2261 = vmul.f32 %v2104, %v1365
        %v2262 = vmul.f32 %v2106, %v1366
        %v2263 = vmul.f32 %v2108, %v1367
        %v2264 = vmul.f32 %v2110, %v1368
        %v2265 = vmul.f32 %v2112, %v1369
        %v2266 = vmul.f32 %v2114, %v1370
        %v2267 = vmul.f32 %v2116, %v1371
        %v2268 = vmul.f32 %v2118, %v1372
        %v2269 = vmul.f32 %v2120, %v1373
        %v2270 = vmul.f32 %v2122, %v1374
        %v2271 = vmul.f32 %v2124, %v1375
        %v2272 = vmul.f32 %v2126, %v1376
        %v2273 = vmul.f32 %v2128, %v1377
        %v2274 = vmul.f32 %v2130, %v1378
        %v2275 = vmul.f32 %v2132, %v1379
        %v2276 = vmul.f32 %v2134, %v1380
        %v2277 = vmul.f32 %v2136, %v1381
        %v2278 = vmul.f32 %v2138, %v1382
        %v2279 = vmul.f32 %v2140, %v1383
        %v2280 = vmul.f32 %v2142, %v1384
        %v2281 = vmul.f32 %v2144, %v1385
        %v2282 = vmul.f32 %v2146, %v1386
        %v2283 = vmul.f32 %v2148, %v1387
        %v2284 = vmul.f32 %v2150, %v1388
        %v2285 = vmul.f32 %v2152, %v1389
        %v2286 = vmul.f32 %v2154, %v1390
        %v2287 = vmul.f32 %v2156, %v1391
        %v2288 = vmul.f32 %v2158, %v1392
        %v2289 = vmul.f32 %v2160, %v1393
        %v2290 = vmul.f32 %v2162, %v1394
        %v2291 = vadd.f32 %v2163, %v2227
        %v2292 = vadd.f32 %v2164, %v2228
        %v2293 = vadd.f32 %v2165, %v2229
        %v2294 = vadd.f32 %v2166, %v2230
        %v2295 = vadd.f32 %v2167, %v2231
        %v2296 = vadd.f32 %v2168, %v2232
        %v2297 = vadd.f32 %v2169, %v2233
        %v2298 = vadd.f32 %v2170, %v2234
        %v2299 = vadd.f32 %v2171, %v2235
        %v2300 = vadd.f32 %v2172, %v2236
        %v2301 = vadd.f32 %v2173, %v2237
        %v2302 = vadd.f32 %v2174, %v2238
        %v2303 = vadd.f32 %v2175, %v2239
        %v2304 = vadd.f32 %v2176, %v2240
        %v2305 = vadd.f32 %v2177, %v2241
        %v2306 = vadd.f32 %v2178, %v2242
        %v2307 = vadd.f32 %v2179, %v2243
        %v2308 = vadd.f32 %v2180, %v2244
        %v2309 = vadd.f32 %v2181, %v2245
        %v2310 = vadd.f32 %v2182, %v2246
        %v2311 = vadd.f32 %v2183, %v2247
        %v2312 = vadd.f32 %v2184, %v2248
        %v2313 = vadd.f32 %v2185, %v2249
        %v2314 = vadd.f32 %v2186, %v2250
        %v2315 = vadd.f32 %v2187, %v2251
        %v2316 = vadd.f32 %v2188, %v2252
        %v2317 = vadd.f32 %v2189, %v2253
        %v2318 = vadd.f32 %v2190, %v2254
        %v2319 = vadd.f32 %v2191, %v2255
        %v2320 = vadd.f32 %v2192, %v2256
        %v2321 = vadd.f32 %v2193, %v2257
        %v2322 = vadd.f32 %v2194, %v2258
        %v2323 = vadd.f32 %v2195, %v2259
        %v2324 = vadd.f32 %v2196, %v2260
        %v2325 = vadd.f32 %v2197, %v2261
        %v2326 = vadd.f32 %v2198, %v2262
        %v2327 = vadd.f32 %v2199, %v2263
        %v2328 = vadd.f32 %v2200, %v2264
        %v2329 = vadd.f32 %v2201, %v2265
        %v2330 = vadd.f32 %v2202, %v2266
        %v2331 = vadd.f32 %v2203, %v2267
        %v2332 = vadd.f32 %v2204, %v2268
        %v2333 = vadd.f32 %v2205, %v2269
        %v2334 = vadd.f32 %v2206, %v2270
        %v2335 = vadd.f32 %v2207, %v2271
        %v2336 = vadd.f32 %v2208, %v2272
        %v2337 = vadd.f32 %v2209, %v2273
        %v2338 = vadd.f32 %v2210, %v2274
        %v2339 = vadd.f32 %v2211, %v2275
        %v2340 = vadd.f32 %v2212, %v2276
        %v2341 = vadd.f32 %v2213, %v2277
        %v2342 = vadd.f32 %v2214, %v2278
        %v2343 = vadd.f32 %v2215, %v2279
        %v2344 = vadd.f32 %v2216, %v2280
        %v2345 = vadd.f32 %v2217, %v2281
        %v2346 = vadd.f32 %v2218, %v2282
        %v2347 = vadd.f32 %v2219, %v2283
        %v2348 = vadd.f32 %v2220, %v2284
        %v2349 = vadd.f32 %v2221, %v2285
        %v2350 = vadd.f32 %v2222, %v2286
        %v2351 = vadd.f32 %v2223, %v2287
        %v2352 = vadd.f32 %v2224, %v2288
        %v2353 = vadd.f32 %v2225, %v2289
        %v2354 = vadd.f32 %v2226, %v2290
        %v2355 = vpack.c.bf16 %v2292, %v2291
        %v2356 = vpack.c.bf16 %v2294, %v2293
        %v2357 = vpack.c.bf16 %v2296, %v2295
        %v2358 = vpack.c.bf16 %v2298, %v2297
        %v2359 = vpack.c.bf16 %v2300, %v2299
        %v2360 = vpack.c.bf16 %v2302, %v2301
        %v2361 = vpack.c.bf16 %v2304, %v2303
        %v2362 = vpack.c.bf16 %v2306, %v2305
        %v2363 = vpack.c.bf16 %v2308, %v2307
        %v2364 = vpack.c.bf16 %v2310, %v2309
        %v2365 = vpack.c.bf16 %v2312, %v2311
        %v2366 = vpack.c.bf16 %v2314, %v2313
        %v2367 = vpack.c.bf16 %v2316, %v2315
        %v2368 = vpack.c.bf16 %v2318, %v2317
        %v2369 = vpack.c.bf16 %v2320, %v2319
        %v2370 = vpack.c.bf16 %v2322, %v2321
        %v2371 = vpack.c.bf16 %v2324, %v2323
        %v2372 = vpack.c.bf16 %v2326, %v2325
        %v2373 = vpack.c.bf16 %v2328, %v2327
        %v2374 = vpack.c.bf16 %v2330, %v2329
        %v2375 = vpack.c.bf16 %v2332, %v2331
        %v2376 = vpack.c.bf16 %v2334, %v2333
        %v2377 = vpack.c.bf16 %v2336, %v2335
        %v2378 = vpack.c.bf16 %v2338, %v2337
        %v2379 = vpack.c.bf16 %v2340, %v2339
        %v2380 = vpack.c.bf16 %v2342, %v2341
        %v2381 = vpack.c.bf16 %v2344, %v2343
        %v2382 = vpack.c.bf16 %v2346, %v2345
        %v2383 = vpack.c.bf16 %v2348, %v2347
        %v2384 = vpack.c.bf16 %v2350, %v2349
        %v2385 = vpack.c.bf16 %v2352, %v2351
        %v2386 = vpack.c.bf16 %v2354, %v2353
        %v2419 = vunpack.c.l.b16 %v2355
        %v2420 = vunpack.c.h.b16 %v2355
        %v2421 = vunpack.c.l.b16 %v2356
        %v2422 = vunpack.c.h.b16 %v2356
        %v2423 = vunpack.c.l.b16 %v2357
        %v2424 = vunpack.c.h.b16 %v2357
        %v2425 = vunpack.c.l.b16 %v2358
        %v2426 = vunpack.c.h.b16 %v2358
        %v2427 = vunpack.c.l.b16 %v2359
        %v2428 = vunpack.c.h.b16 %v2359
        %v2429 = vunpack.c.l.b16 %v2360
        %v2430 = vunpack.c.h.b16 %v2360
        %v2431 = vunpack.c.l.b16 %v2361
        %v2432 = vunpack.c.h.b16 %v2361
        %v2433 = vunpack.c.l.b16 %v2362
        %v2434 = vunpack.c.h.b16 %v2362
        %v2435 = vunpack.c.l.b16 %v2363
        %v2436 = vunpack.c.h.b16 %v2363
        %v2437 = vunpack.c.l.b16 %v2364
        %v2438 = vunpack.c.h.b16 %v2364
        %v2439 = vunpack.c.l.b16 %v2365
        %v2440 = vunpack.c.h.b16 %v2365
        %v2441 = vunpack.c.l.b16 %v2366
        %v2442 = vunpack.c.h.b16 %v2366
        %v2443 = vunpack.c.l.b16 %v2367
        %v2444 = vunpack.c.h.b16 %v2367
        %v2445 = vunpack.c.l.b16 %v2368
        %v2446 = vunpack.c.h.b16 %v2368
        %v2447 = vunpack.c.l.b16 %v2369
        %v2448 = vunpack.c.h.b16 %v2369
        %v2449 = vunpack.c.l.b16 %v2370
        %v2450 = vunpack.c.h.b16 %v2370
        %v2451 = vunpack.c.l.b16 %v2371
        %v2452 = vunpack.c.h.b16 %v2371
        %v2453 = vunpack.c.l.b16 %v2372
        %v2454 = vunpack.c.h.b16 %v2372
        %v2455 = vunpack.c.l.b16 %v2373
        %v2456 = vunpack.c.h.b16 %v2373
        %v2457 = vunpack.c.l.b16 %v2374
        %v2458 = vunpack.c.h.b16 %v2374
        %v2459 = vunpack.c.l.b16 %v2375
        %v2460 = vunpack.c.h.b16 %v2375
        %v2461 = vunpack.c.l.b16 %v2376
        %v2462 = vunpack.c.h.b16 %v2376
        %v2463 = vunpack.c.l.b16 %v2377
        %v2464 = vunpack.c.h.b16 %v2377
        %v2465 = vunpack.c.l.b16 %v2378
        %v2466 = vunpack.c.h.b16 %v2378
        %v2467 = vunpack.c.l.b16 %v2379
        %v2468 = vunpack.c.h.b16 %v2379
        %v2469 = vunpack.c.l.b16 %v2380
        %v2470 = vunpack.c.h.b16 %v2380
        %v2471 = vunpack.c.l.b16 %v2381
        %v2472 = vunpack.c.h.b16 %v2381
        %v2473 = vunpack.c.l.b16 %v2382
        %v2474 = vunpack.c.h.b16 %v2382
        %v2475 = vunpack.c.l.b16 %v2383
        %v2476 = vunpack.c.h.b16 %v2383
        %v2477 = vunpack.c.l.b16 %v2384
        %v2478 = vunpack.c.h.b16 %v2384
        %v2479 = vunpack.c.l.b16 %v2385
        %v2480 = vunpack.c.h.b16 %v2385
        %v2481 = vunpack.c.l.b16 %v2386
        %v2482 = vunpack.c.h.b16 %v2386
        %v2483 = vpack.c.b16 %v2419, %v2419
        %v2484 = vpack.c.b16 %v2420, %v2420
        %v2485 = vpack.c.b16 %v2421, %v2421
        %v2486 = vpack.c.b16 %v2422, %v2422
        %v2487 = vpack.c.b16 %v2423, %v2423
        %v2488 = vpack.c.b16 %v2424, %v2424
        %v2489 = vpack.c.b16 %v2425, %v2425
        %v2490 = vpack.c.b16 %v2426, %v2426
        %v2491 = vpack.c.b16 %v2427, %v2427
        %v2492 = vpack.c.b16 %v2428, %v2428
        %v2493 = vpack.c.b16 %v2429, %v2429
        %v2494 = vpack.c.b16 %v2430, %v2430
        %v2495 = vpack.c.b16 %v2431, %v2431
        %v2496 = vpack.c.b16 %v2432, %v2432
        %v2497 = vpack.c.b16 %v2433, %v2433
        %v2498 = vpack.c.b16 %v2434, %v2434
        %v2499 = vpack.c.b16 %v2435, %v2435
        %v2500 = vpack.c.b16 %v2436, %v2436
        %v2501 = vpack.c.b16 %v2437, %v2437
        %v2502 = vpack.c.b16 %v2438, %v2438
        %v2503 = vpack.c.b16 %v2439, %v2439
        %v2504 = vpack.c.b16 %v2440, %v2440
        %v2505 = vpack.c.b16 %v2441, %v2441
        %v2506 = vpack.c.b16 %v2442, %v2442
        %v2507 = vpack.c.b16 %v2443, %v2443
        %v2508 = vpack.c.b16 %v2444, %v2444
        %v2509 = vpack.c.b16 %v2445, %v2445
        %v2510 = vpack.c.b16 %v2446, %v2446
        %v2511 = vpack.c.b16 %v2447, %v2447
        %v2512 = vpack.c.b16 %v2448, %v2448
        %v2513 = vpack.c.b16 %v2449, %v2449
        %v2514 = vpack.c.b16 %v2450, %v2450
        %v2515 = vpack.c.b16 %v2451, %v2451
        %v2516 = vpack.c.b16 %v2452, %v2452
        %v2517 = vpack.c.b16 %v2453, %v2453
        %v2518 = vpack.c.b16 %v2454, %v2454
        %v2519 = vpack.c.b16 %v2455, %v2455
        %v2520 = vpack.c.b16 %v2456, %v2456
        %v2521 = vpack.c.b16 %v2457, %v2457
        %v2522 = vpack.c.b16 %v2458, %v2458
        %v2523 = vpack.c.b16 %v2459, %v2459
        %v2524 = vpack.c.b16 %v2460, %v2460
        %v2525 = vpack.c.b16 %v2461, %v2461
        %v2526 = vpack.c.b16 %v2462, %v2462
        %v2527 = vpack.c.b16 %v2463, %v2463
        %v2528 = vpack.c.b16 %v2464, %v2464
        %v2529 = vpack.c.b16 %v2465, %v2465
        %v2530 = vpack.c.b16 %v2466, %v2466
        %v2531 = vpack.c.b16 %v2467, %v2467
        %v2532 = vpack.c.b16 %v2468, %v2468
        %v2533 = vpack.c.b16 %v2469, %v2469
        %v2534 = vpack.c.b16 %v2470, %v2470
        %v2535 = vpack.c.b16 %v2471, %v2471
        %v2536 = vpack.c.b16 %v2472, %v2472
        %v2537 = vpack.c.b16 %v2473, %v2473
        %v2538 = vpack.c.b16 %v2474, %v2474
        %v2539 = vpack.c.b16 %v2475, %v2475
        %v2540 = vpack.c.b16 %v2476, %v2476
        %v2541 = vpack.c.b16 %v2477, %v2477
        %v2542 = vpack.c.b16 %v2478, %v2478
        %v2543 = vpack.c.b16 %v2479, %v2479
        %v2544 = vpack.c.b16 %v2480, %v2480
        %v2545 = vpack.c.b16 %v2481, %v2481
        %v2546 = vpack.c.b16 %v2482, %v2482
        %s2611 = scalar_lea.vmem %s321, 256 [#allocation10]
        %2612 = vst [vmem:[%s2611] sm:$0xf] %v2483
        %2613 = vst [vmem:[%s2611 + $0x4] sm:$0xf] %v2484
        %2614 = vst [vmem:[%s2611 + $0x8] sm:$0xf] %v2485
        %2615 = vst [vmem:[%s2611 + $0xc] sm:$0xf] %v2486
        %2616 = vst [vmem:[%s2611 + $0x10] sm:$0xf] %v2487
        %2617 = vst [vmem:[%s2611 + $0x14] sm:$0xf] %v2488
        %2618 = vst [vmem:[%s2611 + $0x18] sm:$0xf] %v2489
        %2619 = vst [vmem:[%s2611 + $0x1c] sm:$0xf] %v2490
        %2620 = vst [vmem:[%s2611 + $0x20] sm:$0xf] %v2491
        %2621 = vst [vmem:[%s2611 + $0x24] sm:$0xf] %v2492
        %2622 = vst [vmem:[%s2611 + $0x28] sm:$0xf] %v2493
        %2623 = vst [vmem:[%s2611 + $0x2c] sm:$0xf] %v2494
        %2624 = vst [vmem:[%s2611 + $0x30] sm:$0xf] %v2495
        %2625 = vst [vmem:[%s2611 + $0x34] sm:$0xf] %v2496
        %2626 = vst [vmem:[%s2611 + $0x38] sm:$0xf] %v2497
        %2627 = vst [vmem:[%s2611 + $0x3c] sm:$0xf] %v2498
        %2628 = vst [vmem:[%s2611 + $0x40] sm:$0xf] %v2499
        %2629 = vst [vmem:[%s2611 + $0x44] sm:$0xf] %v2500
        %2630 = vst [vmem:[%s2611 + $0x48] sm:$0xf] %v2501
        %2631 = vst [vmem:[%s2611 + $0x4c] sm:$0xf] %v2502
        %2632 = vst [vmem:[%s2611 + $0x50] sm:$0xf] %v2503
        %2633 = vst [vmem:[%s2611 + $0x54] sm:$0xf] %v2504
        %2634 = vst [vmem:[%s2611 + $0x58] sm:$0xf] %v2505
        %2635 = vst [vmem:[%s2611 + $0x5c] sm:$0xf] %v2506
        %2636 = vst [vmem:[%s2611 + $0x60] sm:$0xf] %v2507
        %2637 = vst [vmem:[%s2611 + $0x64] sm:$0xf] %v2508
        %2638 = vst [vmem:[%s2611 + $0x68] sm:$0xf] %v2509
        %2639 = vst [vmem:[%s2611 + $0x6c] sm:$0xf] %v2510
        %2640 = vst [vmem:[%s2611 + $0x70] sm:$0xf] %v2511
        %2641 = vst [vmem:[%s2611 + $0x74] sm:$0xf] %v2512
        %2642 = vst [vmem:[%s2611 + $0x78] sm:$0xf] %v2513
        %2643 = vst [vmem:[%s2611 + $0x7c] sm:$0xf] %v2514
        %2644 = vst [vmem:[%s2611 + $0x80] sm:$0xf] %v2515
        %2645 = vst [vmem:[%s2611 + $0x84] sm:$0xf] %v2516
        %2646 = vst [vmem:[%s2611 + $0x88] sm:$0xf] %v2517
        %2647 = vst [vmem:[%s2611 + $0x8c] sm:$0xf] %v2518
        %2648 = vst [vmem:[%s2611 + $0x90] sm:$0xf] %v2519
        %2649 = vst [vmem:[%s2611 + $0x94] sm:$0xf] %v2520
        %2650 = vst [vmem:[%s2611 + $0x98] sm:$0xf] %v2521
        %2651 = vst [vmem:[%s2611 + $0x9c] sm:$0xf] %v2522
        %2652 = vst [vmem:[%s2611 + $0xa0] sm:$0xf] %v2523
        %2653 = vst [vmem:[%s2611 + $0xa4] sm:$0xf] %v2524
        %2654 = vst [vmem:[%s2611 + $0xa8] sm:$0xf] %v2525
        %2655 = vst [vmem:[%s2611 + $0xac] sm:$0xf] %v2526
        %2656 = vst [vmem:[%s2611 + $0xb0] sm:$0xf] %v2527
        %2657 = vst [vmem:[%s2611 + $0xb4] sm:$0xf] %v2528
        %2658 = vst [vmem:[%s2611 + $0xb8] sm:$0xf] %v2529
        %2659 = vst [vmem:[%s2611 + $0xbc] sm:$0xf] %v2530
        %2660 = vst [vmem:[%s2611 + $0xc0] sm:$0xf] %v2531
        %2661 = vst [vmem:[%s2611 + $0xc4] sm:$0xf] %v2532
        %2662 = vst [vmem:[%s2611 + $0xc8] sm:$0xf] %v2533
        %2663 = vst [vmem:[%s2611 + $0xcc] sm:$0xf] %v2534
        %2664 = vst [vmem:[%s2611 + $0xd0] sm:$0xf] %v2535
        %2665 = vst [vmem:[%s2611 + $0xd4] sm:$0xf] %v2536
        %2666 = vst [vmem:[%s2611 + $0xd8] sm:$0xf] %v2537
        %2667 = vst [vmem:[%s2611 + $0xdc] sm:$0xf] %v2538
        %2668 = vst [vmem:[%s2611 + $0xe0] sm:$0xf] %v2539
        %2669 = vst [vmem:[%s2611 + $0xe4] sm:$0xf] %v2540
        %2670 = vst [vmem:[%s2611 + $0xe8] sm:$0xf] %v2541
        %2671 = vst [vmem:[%s2611 + $0xec] sm:$0xf] %v2542
        %2672 = vst [vmem:[%s2611 + $0xf0] sm:$0xf] %v2543
        %2673 = vst [vmem:[%s2611 + $0xf4] sm:$0xf] %v2544
        %2674 = vst [vmem:[%s2611 + $0xf8] sm:$0xf] %v2545
        %2675 = vst [vmem:[%s2611 + $0xfc] sm:$0xf] %v2546
        %s2676 = sand.u32 %s168, 1
        %s2677 = scalar_lea.sflag [#allocation4], %s2676
        %s2678 = sand.u32 %s168, 1
        %s2679 = smul.addr %s2678, 512
        %s2680 = scalar_lea.vmem [#allocation10], %s2679
        // Predicated region
        $region57: #{tpu_custom_call.1} parent=39 // pred_check
          %p2681 = pneg %p178
        $region58: #{tpu_custom_call.1} parent=39 // pred_check_branch
          %2683 = sbr.rel (%p2681) target = $region60
        $region59: #{tpu_custom_call.1} parent=39 // pred_region
          %s2684 = smul.u32 64, %s29
          %s2686 = ssub.s32 8192, 8192
          %2687 = vsyncadd %s2677, %s2686
          %s2688 = smul.addr %s28, 128
          %s2689 = sadd.s32 %s2684, %s2688
          %s2690 = smul.addr %s2689, 64
          %s2691 = scalar_lea.hbm %s5, %s2690
          %s2692 = sshll.u32 %s2680, 4
          %s2693 = int_to_ptr.vmem [resolvable:$true] %s2692
          %2698 = dma.vmem_to_hbm [thread:$0]  %s2693, 8192, %s2691, %s2677, 64, 64, 4
        $region60: #{tpu_custom_call.1} parent=39 // pred_fallthru
          _
      $region40: #{tpu_custom_call.1} parent=5 // pred_fallthru
        _
      %p2699 = scmp.le.s32.totalorder 2, %s19
      // Predicated region
      $region61: #{tpu_custom_call.1} parent=5 // pred_check
        %p2700 = pneg %p2699
      $region62: #{tpu_custom_call.1} parent=5 // pred_check_branch
        %2702 = sbr.rel (%p2700) target = $region64
      $region63: #{tpu_custom_call.1} parent=5 // pred_region
        %s2703 = ssub.s32 %s19, 2
        // Predicated region
        $region65: #{tpu_custom_call.1} parent=63 // pred_check
          %p2704 = pneg %p184
        $region66: #{tpu_custom_call.1} parent=63 // pred_check_branch
          %2706 = sbr.rel (%p2704) target = $region68
        $region67: #{tpu_custom_call.1} parent=63 // pred_region
          %s2707 = sand.u32 %s169, 1
          %s2708 = scalar_lea.sflag [#allocation4], %s2707
          %s2709 = sand.u32 %s169, 1
          %s2710 = smul.addr %s2709, 512
          %s2711 = scalar_lea.vmem [#allocation10], %s2710
          %2712 = dma.done %s2708, 8192
        $region68: #{tpu_custom_call.1} parent=63 // pred_fallthru
          _
      $region64: #{tpu_custom_call.1} parent=5 // pred_fallthru
        _
    $region6: #{tpu_custom_call.1} parent=1 // loop_footer
      %s23 = sadd.s32 1, %s19
    $region7: #{tpu_custom_call.1} parent=1 // loop_footer_branch
      %18 = sbr.rel target = $region3
    $region8: #{tpu_custom_call.1} parent=1 // loop_exit
      _
    %2713 = vsyncpa [#allocation3], 1
    %s2714 = scalar_lea.sflag [#allocation3], 1
    %2715 = vsyncpa %s2714, 1
    %2716 = vsyncpa [#allocation6], 1
    %2717 = vsyncpa [#allocation9], 1
    %2718 = vsyncpa [#allocation4], 1
    %s2719 = scalar_lea.sflag [#allocation4], 1
    %2720 = vsyncpa %s2719, 1

</llo_original>
